<compile_context>
chip_gen: v6e
topology: v6e:2x2x1
jax: 0.10.0
libtpu: 0.0.40
codegen_flags: <defaults>
</compile_context>

<pallas_src>
import functools
import math

import numpy as np
import jax
import jax.numpy as jnp
from jax.experimental import pallas as pl
from jax.experimental.pallas import tpu as pltpu


def _round_up(x, m):
    return ((x + m - 1) // m) * m


# ----------------------------------------------------------------------------
# init-time (buffer) construction -- plain numpy, deterministic
# ----------------------------------------------------------------------------
def _complete_lmax_res(lmax, res_beta, res_alpha):
    if res_beta is None:
        if lmax is not None:
            res_beta = 2 * (lmax + 1)
        elif res_alpha is not None:
            res_beta = 2 * ((res_alpha + 1) // 2)
        else:
            raise ValueError("All the entries are None")
    if res_alpha is None:
        if lmax is not None:
            res_alpha = max(2 * lmax + 1, res_beta - 1)
        else:
            res_alpha = res_beta - 1
    if lmax is None:
        lmax = min(res_beta // 2 - 1, (res_alpha - 1) // 2)
    assert res_beta % 2 == 0
    assert lmax + 1 <= res_beta // 2
    return lmax, res_beta, res_alpha


def _expand_matrix(ls):
    lmax = max(ls)
    m = np.zeros((len(ls), 2 * lmax + 1, sum(2 * l + 1 for l in ls)), dtype=np.float64)
    i = 0
    for j, l in enumerate(ls):
        m[j, lmax - l:lmax + l + 1, i:i + 2 * l + 1] = np.eye(2 * l + 1)
        i += 2 * l + 1
    return m


def _quadrature_weights(b):
    k = np.arange(b, dtype=np.float64)
    w = np.array(
        [
            (2.0 / b)
            * math.sin(math.pi * (2.0 * j + 1.0) / (4.0 * b))
            * np.sum(1.0 / (2 * k + 1) * np.sin((2 * j + 1) * (2 * k + 1) * math.pi / (4.0 * b)))
            for j in range(2 * b)
        ],
        dtype=np.float64,
    )
    w /= 2.0 * (2 * b) ** 2
    return w


def _s2_grid(res_beta, res_alpha):
    betas = (np.arange(res_beta, dtype=np.float64) + 0.5) / res_beta * math.pi
    alphas = np.arange(res_alpha, dtype=np.float64) / res_alpha * 2 * math.pi
    return betas, alphas


def _sh_alpha(lmax, alphas):
    """sha: (res_alpha, 2*lmax+1); columns ordered m = -lmax..lmax (sin | 1 | cos)."""
    a = alphas[:, None]
    ms_up = np.arange(1, lmax + 1, dtype=np.float64)
    cos = np.cos(ms_up * a)                              # (A, lmax)  m = 1..lmax
    ms_dn = np.arange(lmax, 0, -1, dtype=np.float64)
    sin = np.sin(ms_dn * a)                              # (A, lmax)  m = lmax..1
    return np.concatenate([math.sqrt(2) * sin, np.ones_like(a), math.sqrt(2) * cos], axis=1)


def _legendre_shb(lmax, betas):
    """shb: (res_beta, (lmax+1)^2); N_{l|m|} P_l^{|m|}(cos beta) flattened (l, m=-l..l)."""
    z = np.cos(betas)
    y = np.abs(np.sin(betas))
    nb = betas.shape[0]
    P = {}
    for mm in range(lmax + 1):
        pmm = np.ones(nb, dtype=np.float64)
        if mm > 0:
            pmm = float(np.prod(np.arange(1, 2 * mm, 2))) * (y ** mm)   # (2m-1)!! sin^m
        P[(mm, mm)] = pmm
        if mm + 1 <= lmax:
            P[(mm + 1, mm)] = (2 * mm + 1) * z * pmm
        for l in range(mm + 2, lmax + 1):
            P[(l, mm)] = ((2 * l - 1) * z * P[(l - 1, mm)] - (l + mm - 1) * P[(l - 2, mm)]) / (l - mm)
    shb = np.zeros((nb, (lmax + 1) ** 2), dtype=np.float64)
    for l in range(lmax + 1):
        for m_ in range(-l, l + 1):
            am = abs(m_)
            nlm = math.sqrt((2 * l + 1) / (4 * math.pi) * math.factorial(l - am) / math.factorial(l + am))
            shb[:, l * l + l + m_] = nlm * P[(l, am)]
    return shb


def _np_rfft_sincos(x, l):
    """NumPy equivalent of e3nn's rfft(): (..., A) real -> (..., 2l+1), (sin | 1 | cos) ordering."""
    X = np.fft.rfft(x, axis=-1)
    sin_part = -math.sqrt(2) * X[..., 1:l + 1].imag[..., ::-1]
    const = X[..., :1].real
    cos_part = math.sqrt(2) * X[..., 1:l + 1].real
    return np.concatenate([sin_part, const, cos_part], axis=-1)


# ----------------------------------------------------------------------------
# Pallas kernel: one fused lane-dense matmul per batch tile
# ----------------------------------------------------------------------------
def _from_s2grid_kernel(x_ref, w_ref, o_ref, *, precision):
    # x_ref : (tz, B*A)     flattened sphere signals (lane-dense)
    # w_ref : (B*A, I_pad)  fused sha/shb/quadrature/normalization weight
    # o_ref : (tz, I_pad)   spherical-tensor output (I padded to 128 lanes)
    o_ref[...] = jnp.dot(
        x_ref[...], w_ref[...],
        preferred_element_type=jnp.float32,
        precision=precision,
    ).astype(o_ref.dtype)


def _vmem_capacity_bytes():
    """Physical VMEM per TensorCore; conservative fallback if the query fails."""
    try:
        return int(pltpu.get_tpu_info().vmem_capacity_bytes)
    except Exception:
        return 64 << 20          # v7x per-TC size; safe lower bound for v5e/v6e too


def _from_s2grid_pallas(x_zk, w_ki, *, max_tz=2048, single_buffer_w=True,
                        precision=jax.lax.Precision.HIGHEST):
    """(Z, B*A) @ (B*A, I_pad) -> padded (Z, I_pad); caller slices inside the same jit."""
    z, k = x_zk.shape
    kw, ni_pad = w_ki.shape
    assert kw == k
    x_el = x_zk.dtype.itemsize
    w_el = w_ki.dtype.itemsize

    # Generation-aware VMEM budget (~24-32 MiB usable on v5e/v6e/v7x), made legal
    # via an explicit vmem_limit_bytes instead of the 16/32 MiB scoped defaults.
    cap = _vmem_capacity_bytes()
    budget = min(32 << 20, max(12 << 20, cap // 2))
    vmem_limit = int(min(cap * 3 // 4, budget + (16 << 20)))

    w_bufs = 1 if single_buffer_w else 2
    w_bytes = w_bufs * k * ni_pad * w_el                 # constant weight, fetched once
    row_bytes = 2 * (k * x_el + ni_pad * 4)              # double-buffered in + out per row

    if z <= 8:
        tz = z                                           # full-array batch block (always legal)
    else:
        tz_cap = max(8, ((budget - w_bytes) // max(row_bytes, 1) // 8) * 8)
        tz = min(max_tz, tz_cap)
        # >= 2 grid steps so both v7x TensorCores get work under "parallel".
        tz = min(tz, _round_up(-(-z // 2), 8))
        tz = max(tz, 8)

    grid = (pl.cdiv(z, tz),)                             # ragged tail -> partial blocks

    if single_buffer_w:
        # Constant index_map => fetched once; Buffered(1) drops the second buffer.
        w_spec = pl.BlockSpec((k, ni_pad), lambda i: (0, 0), pipeline_mode=pl.Buffered(1))
    else:
        w_spec = pl.BlockSpec((k, ni_pad), lambda i: (0, 0))

    cost = pl.CostEstimate(
        flops=2 * z * k * ni_pad,
        transcendentals=0,
        bytes_accessed=z * k * x_el + k * ni_pad * w_el + z * ni_pad * 4,
    )

    return pl.pallas_call(
        functools.partial(_from_s2grid_kernel, precision=precision),
        out_shape=jax.ShapeDtypeStruct((z, ni_pad), jnp.float32),
        grid_spec=pltpu.PrefetchScalarGridSpec(
            num_scalar_prefetch=0,
            grid=grid,
            in_specs=[
                pl.BlockSpec((tz, k), lambda i: (i, 0)),
                w_spec,
            ],
            out_specs=pl.BlockSpec((tz, ni_pad), lambda i: (i, 0)),
        ),
        compiler_params=pltpu.CompilerParams(
            dimension_semantics=("parallel",),
            vmem_limit_bytes=vmem_limit,
        ),
        cost_estimate=cost,
    )(x_zk, w_ki)


# ----------------------------------------------------------------------------
# module equivalent
# ----------------------------------------------------------------------------
class FromS2GridJax:
    def __init__(self, res=None, lmax=None, normalization="component", lmax_in=None,
                 use_bf16=False):
        assert normalization in ("norm", "component", "integral")
        if isinstance(res, int) or res is None:
            lmax, res_beta, res_alpha = _complete_lmax_res(lmax, res, None)
        else:
            lmax, res_beta, res_alpha = _complete_lmax_res(lmax, *res)
        if lmax_in is None:
            lmax_in = lmax

        betas, alphas = _s2_grid(res_beta, res_alpha)
        shb_raw = _legendre_shb(lmax, betas)             # (B, (lmax+1)^2)
        sha = _sh_alpha(lmax, alphas)                    # (A, 2*lmax+1)

        ls = np.arange(lmax + 1, dtype=np.float64)
        if normalization == "component":
            n = math.sqrt(4 * math.pi) * np.sqrt(2 * ls + 1) * math.sqrt(lmax_in + 1)
        elif normalization == "norm":
            n = math.sqrt(4 * math.pi) * np.ones(lmax + 1) * math.sqrt(lmax_in + 1)
        else:  # integral
            n = 4 * math.pi * np.ones(lmax + 1)

        m = _expand_matrix(list(range(lmax + 1)))        # (l, 2*lmax+1, (lmax+1)^2)
        assert res_beta % 2 == 0
        qw = _quadrature_weights(res_beta // 2) * res_beta ** 2 / res_alpha     # (B,)
        shb = np.einsum("lmj,bj,lmi,l,b->mbi", m, shb_raw, m, n, qw)            # (M, B, I)

        # Fuse both contractions into one weight: W[b*A+a, i] = sum_m sha[a,m]*shb[m,b,i]
        w = np.einsum("am,mbi->bai", sha, shb)                                  # (B, A, I)
        ni = w.shape[-1]
        ni_pad = _round_up(ni, 128)
        # NOTE: for best lane occupancy pick resolutions with B*A a multiple of 128.
        w_flat = np.zeros((res_beta * res_alpha, ni_pad), dtype=np.float64)
        w_flat[:, :ni] = w.reshape(res_beta * res_alpha, ni)

        self.lmax, self.res_beta, self.res_alpha = lmax, res_beta, res_alpha
        self.ni, self.ni_pad = ni, ni_pad
        self.use_bf16 = use_bf16
        self._sha_np = sha                                                      # f64 reference buffers
        self._shb_np = shb
        self.sha = jnp.asarray(sha, dtype=jnp.float32)                          # (A, M)
        self.shb = jnp.asarray(shb, dtype=jnp.float32)                          # (M, B, I)

        w_dtype = jnp.bfloat16 if use_bf16 else jnp.float32
        self.w = jnp.asarray(w_flat, dtype=w_dtype)                             # (B*A, I_pad) kernel weight
        self._x_dtype = jnp.bfloat16 if use_bf16 else jnp.float32
        # Explicit MXU precision: HIGHEST keeps the 1e-4 tolerance for the f32
        # path; the bf16 path is single-pass anyway (DEFAULT).
        self._precision = jax.lax.Precision.DEFAULT if use_bf16 else jax.lax.Precision.HIGHEST

        self._single_buffer_w = True
        self._forward = jax.jit(functools.partial(self._forward_impl, single_buffer_w=True))

    # --- forward -------------------------------------------------------------
    def _forward_impl(self, x, *, single_buffer_w):
        size = x.shape[:-2]
        res_beta, res_alpha = x.shape[-2:]
        assert res_beta == self.res_beta and res_alpha == self.res_alpha
        x_flat = x.reshape(-1, res_beta * res_alpha).astype(self._x_dtype)      # (Z, B*A) lane-dense
        out_pad = _from_s2grid_pallas(
            x_flat, self.w,
            single_buffer_w=single_buffer_w,
            precision=self._precision,
        )
        # Slice + reshape stay inside the same jit so XLA can fuse them with the
        # consumer instead of a separate eager HBM pass over the padded output.
        return out_pad[:, :self.ni].reshape(*size, self.ni)

    def __call__(self, x):
        try:
            return self._forward(x)
        except Exception:
            if self._single_buffer_w:
                # TODO(synk): fallback in case pl.Buffered(1) single-buffering of the
                # constant weight is rejected by this jax/libtpu combination.
                self._single_buffer_w = False
                self._forward = jax.jit(
                    functools.partial(self._forward_impl, single_buffer_w=False))
                return self._forward(x)
            raise

    # --- references ------------------------------------------------------------
    def reference(self, x):
        """NumPy float64 reference of the PyTorch forward, including torch's
        rfft fast-path branch selection (sm <= sa and sa odd)."""
        x = np.asarray(x, dtype=np.float64)
        size = x.shape[:-2]
        x = x.reshape(-1, self.res_beta, self.res_alpha)
        sa, sm = self._sha_np.shape
        if sm <= sa and sa % 2 == 1:
            xm = _np_rfft_sincos(x, sm // 2)                        # torch.fft.rfft branch
        else:
            xm = np.einsum("am,zba->zbm", self._sha_np, x)          # einsum branch
        out = np.einsum("mbi,zbm->zi", self._shb_np, xm)
        return out.reshape(*size, out.shape[-1])


# ----------------------------------------------------------------------------
if __name__ == "__main__":
    key = jax.random.PRNGKey(0)
    k1, k2 = jax.random.split(key)

    # --- test 1: even res_alpha (torch uses the einsum branch) ----------------
    res_beta, res_alpha, lmax = 16, 16, 4
    mod = FromS2GridJax(res=(res_beta, res_alpha), lmax=lmax, normalization="component")
    x = jax.random.normal(k1, (2, 4, res_beta, res_alpha), dtype=jnp.float32)
    out = jax.block_until_ready(mod(x))
    assert out.shape == (2, 4, (lmax + 1) ** 2), out.shape
    err = float(np.max(np.abs(np.asarray(out) - mod.reference(x))))
    assert err < 1e-4, f"einsum-branch max abs error {err}"

    # --- test 2: odd res_alpha (torch uses the rfft fast path) ----------------
    mod2 = FromS2GridJax(res=(12, 11), lmax=4, normalization="component")
    x2 = jax.random.normal(k2, (3, 12, 11), dtype=jnp.float32)
    out2 = jax.block_until_ready(mod2(x2))
    assert out2.shape == (3, 25), out2.shape
    err2 = float(np.max(np.abs(np.asarray(out2) - mod2.reference(x2))))
    assert err2 < 1e-4, f"rfft-branch max abs error {err2}"

    print("KERNEL_OK")
</pallas_src>

<mosaic_0001>
module attributes {stable_mosaic.version = 11 : i64} {
  func.func @_from_s2grid_kernel(%arg0: i32, %arg1: memref<8x256xf32, #tpu.memory_space<vmem>>, %arg2: memref<256x128xf32, #tpu.memory_space<vmem>>, %arg3: memref<8x128xf32, #tpu.memory_space<vmem>>) attributes {dimension_semantics = [#tpu.dimension_semantics<parallel>], iteration_bounds = array<i64: 1>, scalar_prefetch = 0 : i64, scratch_operands = 0 : i64, tpu.core_type = #tpu.core_type<tc>, window_params = [{transform_indices = @transform_0, window_bounds = array<i64: 8, 256>}, {pipeline_mode = #tpu.pipeline_mode<synchronous>, transform_indices = @transform_1, window_bounds = array<i64: 256, 128>}, {transform_indices = @transform_2, window_bounds = array<i64: 8, 128>}]} {
    %c0 = arith.constant 0 : index
    %c0_0 = arith.constant 0 : index
    %0 = vector.load %arg1[%c0, %c0_0] : memref<8x256xf32, #tpu.memory_space<vmem>>, vector<8x256xf32>
    %c0_1 = arith.constant 0 : index
    %c0_2 = arith.constant 0 : index
    %1 = vector.load %arg2[%c0_1, %c0_2] : memref<256x128xf32, #tpu.memory_space<vmem>>, vector<256x128xf32>
    %cst = arith.constant dense<0.000000e+00> : vector<8x128xf32>
    %2 = tpu.matmul %0, %1, %cst {dimension_numbers = #tpu.dot_dimension_numbers<[1], [0], [0], [1], [0, 0, 1, 1], [], []>, precision = #tpu.contract_precision<fp32>} : vector<8x256xf32>, vector<256x128xf32>, vector<8x128xf32> -> vector<8x128xf32>
    %c0_3 = arith.constant 0 : index
    %c0_4 = arith.constant 0 : index
    %3 = vector.load %arg3[%c0_3, %c0_4] : memref<8x128xf32, #tpu.memory_space<vmem>>, vector<8x128xf32>
    tpu.vector_store %arg3[%c0_3, %c0_4], %2 {strides = array<i32>} : memref<8x128xf32, #tpu.memory_space<vmem>>, vector<8x128xf32>,
    return
  }
  func.func @transform_0(%arg0: i32) -> (i32, i32) {
    %c0_i32 = arith.constant 0 : i32
    %c0_i32_0 = arith.constant 0 : i32
    return %arg0, %c0_i32 : i32, i32
  }
  func.func @transform_1(%arg0: i32) -> (i32, i32) {
    %c0_i32 = arith.constant 0 : i32
    %c0_i32_0 = arith.constant 0 : i32
    %c0_i32_1 = arith.constant 0 : i32
    return %c0_i32, %c0_i32_0 : i32, i32
  }
  func.func @transform_2(%arg0: i32) -> (i32, i32) {
    %c0_i32 = arith.constant 0 : i32
    %c0_i32_0 = arith.constant 0 : i32
    return %arg0, %c0_i32 : i32, i32
  }
}

module attributes {stable_mosaic.version = 11 : i64} {
  func.func @_from_s2grid_kernel(%arg0: i32, %arg1: memref<8x256xf32, #tpu.memory_space<vmem>>, %arg2: memref<256x128xf32, #tpu.memory_space<vmem>>, %arg3: memref<8x128xf32, #tpu.memory_space<vmem>>) attributes {dimension_semantics = [#tpu.dimension_semantics<parallel>], iteration_bounds = array<i64: 1>, scalar_prefetch = 0 : i64, scratch_operands = 0 : i64, tpu.core_type = #tpu.core_type<tc>, window_params = [{transform_indices = @transform_0, window_bounds = array<i64: 8, 256>}, {pipeline_mode = #tpu.pipeline_mode<synchronous>, transform_indices = @transform_1, window_bounds = array<i64: 256, 128>}, {transform_indices = @transform_2, window_bounds = array<i64: 8, 128>}]} {
    %c0 = arith.constant 0 : index
    %c0_0 = arith.constant 0 : index
    %0 = vector.load %arg1[%c0, %c0_0] : memref<8x256xf32, #tpu.memory_space<vmem>>, vector<8x256xf32>
    %c0_1 = arith.constant 0 : index
    %c0_2 = arith.constant 0 : index
    %1 = vector.load %arg2[%c0_1, %c0_2] : memref<256x128xf32, #tpu.memory_space<vmem>>, vector<256x128xf32>
    %cst = arith.constant dense<0.000000e+00> : vector<8x128xf32>
    %2 = tpu.matmul %0, %1, %cst {dimension_numbers = #tpu.dot_dimension_numbers<[1], [0], [0], [1], [0, 0, 1, 1], [], []>, precision = #tpu.contract_precision<fp32>} : vector<8x256xf32>, vector<256x128xf32>, vector<8x128xf32> -> vector<8x128xf32>
    %c0_3 = arith.constant 0 : index
    %c0_4 = arith.constant 0 : index
    %3 = vector.load %arg3[%c0_3, %c0_4] : memref<8x128xf32, #tpu.memory_space<vmem>>, vector<8x128xf32>
    tpu.vector_store %arg3[%c0_3, %c0_4], %2 {strides = array<i32>} : memref<8x128xf32, #tpu.memory_space<vmem>>, vector<8x128xf32>,
    return
  }
  func.func @transform_0(%arg0: i32) -> (i32, i32) {
    %c0_i32 = arith.constant 0 : i32
    %c0_i32_0 = arith.constant 0 : i32
    return %arg0, %c0_i32 : i32, i32
  }
  func.func @transform_1(%arg0: i32) -> (i32, i32) {
    %c0_i32 = arith.constant 0 : i32
    %c0_i32_0 = arith.constant 0 : i32
    %c0_i32_1 = arith.constant 0 : i32
    return %c0_i32, %c0_i32_0 : i32, i32
  }
  func.func @transform_2(%arg0: i32) -> (i32, i32) {
    %c0_i32 = arith.constant 0 : i32
    %c0_i32_0 = arith.constant 0 : i32
    return %arg0, %c0_i32 : i32, i32
  }
}

</mosaic_0001>

<llo_original>
// kernel: _forward_impl.1
$region0: #{_forward_impl.1}
  #allocation0 [shape = 'u32[]', space=smem, size = 0x4, offset = 0x4, fixed_abs, tag = 'smem constant byte address 0x4 - core index']
  #allocation1 [shape = 'u32[144,128]{1,0:T(1,128)}', space=vmem, size = 0x12000, scoped, tag = 'internal scratch']
  %s0 = inlined_call_operand.vmem [shape: f32[8,256], index: 0, kind: input, shape index: {}]
  %s1 = inlined_call_operand.hbm [shape: f32[256,128], index: 1, kind: input, shape index: {}]
  %s2 = inlined_call_operand.hbm [shape: f32[8,128], index: 2, kind: output, shape index: {}]
  %s3 = sld [smem:[#allocation0]]
  $region22: #{_forward_impl.1} parent=0
    _
  %s5 = ssub.s32 1, %s3
  %s6 = scalar_select 0, %s5, %s3
  $region1: #{_forward_impl.1} parent=0
    #allocation2 [shape = 'u8[131072]{0}', space=vmem, size = 0x20000, scoped, tag = 'input window, operand 1, single buffered']
    #allocation3 [shape = 's32[1]{0}', space=sflag, size = 0x4, scoped, tag = 'scoped memory for _forward_impl.1']
    #allocation4 [shape = 's32[1]{0}', space=sflag, size = 0x4, scoped, tag = 'scoped memory for _forward_impl.1']
    #allocation5 [shape = 'u8[4096]{0}', space=vmem, size = 0x1000, scoped, tag = 'output window, operand 0, single buffered']
    %7 = vsyncpa [#allocation3], 0
    %8 = vsyncpa [#allocation4], 0
    // Predicated region
    $region2: #{_forward_impl.1} parent=1 // pred_check
      _
    $region3: #{_forward_impl.1} parent=1 // pred_check_branch
      %10 = sbr.rel (0) target = $region5
    $region4: #{_forward_impl.1} parent=1 // pred_region
      _
    $region5: #{_forward_impl.1} parent=1 // pred_fallthru
      _
    // Predicated region
    $region6: #{_forward_impl.1} parent=1 // pred_check
      _
    $region7: #{_forward_impl.1} parent=1 // pred_check_branch
      %12 = sbr.rel (0) target = $region9
    $region8: #{_forward_impl.1} parent=1 // pred_region
      %s14 = ssub.s32 4096, 4096
      %15 = vsyncadd [#allocation3], %s14
      %s16 = sshll.u32 [#allocation2], 4
      %s17 = int_to_ptr.vmem [resolvable:$true] %s16
      %22 = dma.hbm_to_vmem [thread:$0]  %s1, 4096, %s17, [#allocation3], 128, 128, 8
    $region9: #{_forward_impl.1} parent=1 // pred_fallthru
      _
    // Predicated region
    $region10: #{_forward_impl.1} parent=1 // pred_check
      _
    $region11: #{_forward_impl.1} parent=1 // pred_check_branch
      %24 = sbr.rel (0) target = $region13
    $region12: #{_forward_impl.1} parent=1 // pred_region
      %25 = dma.done [#allocation3], 4096
    $region13: #{_forward_impl.1} parent=1 // pred_fallthru
      _
    %v26 = vld [vmem:[%s0] sm:$0xff]
    %v27 = vld [vmem:[%s0 + $0x8] sm:$0xff]
    %v28 = vld [vmem:[#allocation2] sm:$0xff]
    %v29 = vld [vmem:[#allocation2 + $0x8] sm:$0xff]
    %v30 = vld [vmem:[#allocation2 + $0x10] sm:$0xff]
    %v31 = vld [vmem:[#allocation2 + $0x18] sm:$0xff]
    %v32 = vld [vmem:[#allocation2 + $0x20] sm:$0xff]
    %v33 = vld [vmem:[#allocation2 + $0x28] sm:$0xff]
    %v34 = vld [vmem:[#allocation2 + $0x30] sm:$0xff]
    %v35 = vld [vmem:[#allocation2 + $0x38] sm:$0xff]
    %v36 = vld [vmem:[#allocation2 + $0x40] sm:$0xff]
    %v37 = vld [vmem:[#allocation2 + $0x48] sm:$0xff]
    %v38 = vld [vmem:[#allocation2 + $0x50] sm:$0xff]
    %v39 = vld [vmem:[#allocation2 + $0x58] sm:$0xff]
    %v40 = vld [vmem:[#allocation2 + $0x60] sm:$0xff]
    %v41 = vld [vmem:[#allocation2 + $0x68] sm:$0xff]
    %v42 = vld [vmem:[#allocation2 + $0x70] sm:$0xff]
    %v43 = vld [vmem:[#allocation2 + $0x78] sm:$0xff]
    %v44 = vld [vmem:[#allocation2 + $0x80] sm:$0xff]
    %v45 = vld [vmem:[#allocation2 + $0x88] sm:$0xff]
    %v46 = vld [vmem:[#allocation2 + $0x90] sm:$0xff]
    %v47 = vld [vmem:[#allocation2 + $0x98] sm:$0xff]
    %v48 = vld [vmem:[#allocation2 + $0xa0] sm:$0xff]
    %v49 = vld [vmem:[#allocation2 + $0xa8] sm:$0xff]
    %v50 = vld [vmem:[#allocation2 + $0xb0] sm:$0xff]
    %v51 = vld [vmem:[#allocation2 + $0xb8] sm:$0xff]
    %v52 = vld [vmem:[#allocation2 + $0xc0] sm:$0xff]
    %v53 = vld [vmem:[#allocation2 + $0xc8] sm:$0xff]
    %v54 = vld [vmem:[#allocation2 + $0xd0] sm:$0xff]
    %v55 = vld [vmem:[#allocation2 + $0xd8] sm:$0xff]
    %v56 = vld [vmem:[#allocation2 + $0xe0] sm:$0xff]
    %v57 = vld [vmem:[#allocation2 + $0xe8] sm:$0xff]
    %v58 = vld [vmem:[#allocation2 + $0xf0] sm:$0xff]
    %v59 = vld [vmem:[#allocation2 + $0xf8] sm:$0xff]
    %60 = vmatprep.subr.mxu0 0.0
    %v61 = vand.u32 %v43, 4294901760
    %62 = vmatpush1.msra.mxu0 %v61
    %63 = vmatprep.subr.mxu0 0.0
    %v64 = vand.u32 %v42, 4294901760
    %65 = vmatpush1.msra.mxu0 %v64
    %66 = vmatprep.subr.mxu0 0.0
    %v67 = vand.u32 %v41, 4294901760
    %68 = vmatpush1.msra.mxu0 %v67
    %69 = vmatprep.subr.mxu0 0.0
    %v70 = vand.u32 %v40, 4294901760
    %71 = vmatpush1.msra.mxu0 %v70
    %72 = vmatprep.subr.mxu0 0.0
    %v73 = vand.u32 %v39, 4294901760
    %74 = vmatpush1.msra.mxu0 %v73
    %75 = vmatprep.subr.mxu0 0.0
    %v76 = vand.u32 %v38, 4294901760
    %77 = vmatpush1.msra.mxu0 %v76
    %78 = vmatprep.subr.mxu0 0.0
    %v79 = vand.u32 %v37, 4294901760
    %80 = vmatpush1.msra.mxu0 %v79
    %81 = vmatprep.subr.mxu0 0.0
    %v82 = vand.u32 %v36, 4294901760
    %83 = vmatpush1.msra.mxu0 %v82
    %84 = vmatprep.subr.mxu0 0.0
    %v85 = vand.u32 %v35, 4294901760
    %86 = vmatpush1.msra.mxu0 %v85
    %87 = vmatprep.subr.mxu0 0.0
    %v88 = vand.u32 %v34, 4294901760
    %89 = vmatpush1.msra.mxu0 %v88
    %90 = vmatprep.subr.mxu0 0.0
    %v91 = vand.u32 %v33, 4294901760
    %92 = vmatpush1.msra.mxu0 %v91
    %93 = vmatprep.subr.mxu0 0.0
    %v94 = vand.u32 %v32, 4294901760
    %95 = vmatpush1.msra.mxu0 %v94
    %96 = vmatprep.subr.mxu0 0.0
    %v97 = vand.u32 %v31, 4294901760
    %98 = vmatpush1.msra.mxu0 %v97
    %99 = vmatprep.subr.mxu0 0.0
    %v100 = vand.u32 %v30, 4294901760
    %101 = vmatpush1.msra.mxu0 %v100
    %102 = vmatprep.subr.mxu0 0.0
    %v103 = vand.u32 %v29, 4294901760
    %104 = vmatpush1.msra.mxu0 %v103
    %105 = vmatprep.subr.mxu0 0.0
    %v106 = vand.u32 %v28, 4294901760
    %107 = vmatpush1.msra.mxu0 %v106
    %108 = vmatprep.subr.mxu0 0.0
    %v109 = vand.u32 %v59, 4294901760
    %110 = vmatpush2.msra.mxu0 %v109
    %111 = vmatprep.subr.mxu0 0.0
    %v112 = vand.u32 %v58, 4294901760
    %113 = vmatpush2.msra.mxu0 %v112
    %114 = vmatprep.subr.mxu0 0.0
    %v115 = vand.u32 %v57, 4294901760
    %116 = vmatpush2.msra.mxu0 %v115
    %117 = vmatprep.subr.mxu0 0.0
    %v118 = vand.u32 %v56, 4294901760
    %119 = vmatpush2.msra.mxu0 %v118
    %120 = vmatprep.subr.mxu0 0.0
    %v121 = vand.u32 %v55, 4294901760
    %122 = vmatpush2.msra.mxu0 %v121
    %123 = vmatprep.subr.mxu0 0.0
    %v124 = vand.u32 %v54, 4294901760
    %125 = vmatpush2.msra.mxu0 %v124
    %126 = vmatprep.subr.mxu0 0.0
    %v127 = vand.u32 %v53, 4294901760
    %128 = vmatpush2.msra.mxu0 %v127
    %129 = vmatprep.subr.mxu0 0.0
    %v130 = vand.u32 %v52, 4294901760
    %131 = vmatpush2.msra.mxu0 %v130
    %132 = vmatprep.subr.mxu0 0.0
    %v133 = vand.u32 %v51, 4294901760
    %134 = vmatpush2.msra.mxu0 %v133
    %135 = vmatprep.subr.mxu0 0.0
    %v136 = vand.u32 %v50, 4294901760
    %137 = vmatpush2.msra.mxu0 %v136
    %138 = vmatprep.subr.mxu0 0.0
    %v139 = vand.u32 %v49, 4294901760
    %140 = vmatpush2.msra.mxu0 %v139
    %141 = vmatprep.subr.mxu0 0.0
    %v142 = vand.u32 %v48, 4294901760
    %143 = vmatpush2.msra.mxu0 %v142
    %144 = vmatprep.subr.mxu0 0.0
    %v145 = vand.u32 %v47, 4294901760
    %146 = vmatpush2.msra.mxu0 %v145
    %147 = vmatprep.subr.mxu0 0.0
    %v148 = vand.u32 %v46, 4294901760
    %149 = vmatpush2.msra.mxu0 %v148
    %150 = vmatprep.subr.mxu0 0.0
    %v151 = vand.u32 %v45, 4294901760
    %152 = vmatpush2.msra.mxu0 %v151
    %153 = vmatprep.subr.mxu0 0.0
    %v154 = vand.u32 %v44, 4294901760
    %155 = vmatpush2.msra.mxu0 %v154
    %v156 = vand.u32 %v27, 4294901760
    %v157 = vsub.f32 %v27, %v156
    %v158 = vand.u32 %v157, 4294901760
    %v159 = vsub.f32 %v157, %v158
    %v160 = vand.u32 %v159, 4294901760
    %161 = vmatprep.mubr.f32.mxu0 %v160
    %v162 = vand.u32 %v26, 4294901760
    %v163 = vsub.f32 %v26, %v162
    %v164 = vand.u32 %v163, 4294901760
    %v165 = vsub.f32 %v163, %v164
    %v166 = vand.u32 %v165, 4294901760
    %167 = vmatmul.mubr.f32.gmra.mxu0 %v166
    %v168 = vpop.f32.mrf.mxu0
    %v169 = vadd.f32 0.0, %v168
    %v170 = vpop.f32.mrf.mxu0
    %171 = vdwg.mxu0
    %172 = vmatprep.subr.mxu0 0.0
    %v173 = vand.u32 %v43, 4294901760
    %v174 = vsub.f32 %v43, %v173
    %v175 = vand.u32 %v174, 4294901760
    %v176 = vsub.f32 %v174, %v175
    %v177 = vand.u32 %v176, 4294901760
    %178 = vmatpush1.msra.mxu0 %v177
    %179 = vmatprep.subr.mxu0 0.0
    %v180 = vand.u32 %v42, 4294901760
    %v181 = vsub.f32 %v42, %v180
    %v182 = vand.u32 %v181, 4294901760
    %v183 = vsub.f32 %v181, %v182
    %v184 = vand.u32 %v183, 4294901760
    %185 = vmatpush1.msra.mxu0 %v184
    %186 = vmatprep.subr.mxu0 0.0
    %v187 = vand.u32 %v41, 4294901760
    %v188 = vsub.f32 %v41, %v187
    %v189 = vand.u32 %v188, 4294901760
    %v190 = vsub.f32 %v188, %v189
    %v191 = vand.u32 %v190, 4294901760
    %192 = vmatpush1.msra.mxu0 %v191
    %193 = vmatprep.subr.mxu0 0.0
    %v194 = vand.u32 %v40, 4294901760
    %v195 = vsub.f32 %v40, %v194
    %v196 = vand.u32 %v195, 4294901760
    %v197 = vsub.f32 %v195, %v196
    %v198 = vand.u32 %v197, 4294901760
    %199 = vmatpush1.msra.mxu0 %v198
    %200 = vmatprep.subr.mxu0 0.0
    %v201 = vand.u32 %v39, 4294901760
    %v202 = vsub.f32 %v39, %v201
    %v203 = vand.u32 %v202, 4294901760
    %v204 = vsub.f32 %v202, %v203
    %v205 = vand.u32 %v204, 4294901760
    %206 = vmatpush1.msra.mxu0 %v205
    %207 = vmatprep.subr.mxu0 0.0
    %v208 = vand.u32 %v38, 4294901760
    %v209 = vsub.f32 %v38, %v208
    %v210 = vand.u32 %v209, 4294901760
    %v211 = vsub.f32 %v209, %v210
    %v212 = vand.u32 %v211, 4294901760
    %213 = vmatpush1.msra.mxu0 %v212
    %214 = vmatprep.subr.mxu0 0.0
    %v215 = vand.u32 %v37, 4294901760
    %v216 = vsub.f32 %v37, %v215
    %v217 = vand.u32 %v216, 4294901760
    %v218 = vsub.f32 %v216, %v217
    %v219 = vand.u32 %v218, 4294901760
    %220 = vmatpush1.msra.mxu0 %v219
    %221 = vmatprep.subr.mxu0 0.0
    %v222 = vand.u32 %v36, 4294901760
    %v223 = vsub.f32 %v36, %v222
    %v224 = vand.u32 %v223, 4294901760
    %v225 = vsub.f32 %v223, %v224
    %v226 = vand.u32 %v225, 4294901760
    %227 = vmatpush1.msra.mxu0 %v226
    %228 = vmatprep.subr.mxu0 0.0
    %v229 = vand.u32 %v35, 4294901760
    %v230 = vsub.f32 %v35, %v229
    %v231 = vand.u32 %v230, 4294901760
    %v232 = vsub.f32 %v230, %v231
    %v233 = vand.u32 %v232, 4294901760
    %234 = vmatpush1.msra.mxu0 %v233
    %235 = vmatprep.subr.mxu0 0.0
    %v236 = vand.u32 %v34, 4294901760
    %v237 = vsub.f32 %v34, %v236
    %v238 = vand.u32 %v237, 4294901760
    %v239 = vsub.f32 %v237, %v238
    %v240 = vand.u32 %v239, 4294901760
    %241 = vmatpush1.msra.mxu0 %v240
    %242 = vmatprep.subr.mxu0 0.0
    %v243 = vand.u32 %v33, 4294901760
    %v244 = vsub.f32 %v33, %v243
    %v245 = vand.u32 %v244, 4294901760
    %v246 = vsub.f32 %v244, %v245
    %v247 = vand.u32 %v246, 4294901760
    %248 = vmatpush1.msra.mxu0 %v247
    %249 = vmatprep.subr.mxu0 0.0
    %v250 = vand.u32 %v32, 4294901760
    %v251 = vsub.f32 %v32, %v250
    %v252 = vand.u32 %v251, 4294901760
    %v253 = vsub.f32 %v251, %v252
    %v254 = vand.u32 %v253, 4294901760
    %255 = vmatpush1.msra.mxu0 %v254
    %256 = vmatprep.subr.mxu0 0.0
    %v257 = vand.u32 %v31, 4294901760
    %v258 = vsub.f32 %v31, %v257
    %v259 = vand.u32 %v258, 4294901760
    %v260 = vsub.f32 %v258, %v259
    %v261 = vand.u32 %v260, 4294901760
    %262 = vmatpush1.msra.mxu0 %v261
    %263 = vmatprep.subr.mxu0 0.0
    %v264 = vand.u32 %v30, 4294901760
    %v265 = vsub.f32 %v30, %v264
    %v266 = vand.u32 %v265, 4294901760
    %v267 = vsub.f32 %v265, %v266
    %v268 = vand.u32 %v267, 4294901760
    %269 = vmatpush1.msra.mxu0 %v268
    %270 = vmatprep.subr.mxu0 0.0
    %v271 = vand.u32 %v29, 4294901760
    %v272 = vsub.f32 %v29, %v271
    %v273 = vand.u32 %v272, 4294901760
    %v274 = vsub.f32 %v272, %v273
    %v275 = vand.u32 %v274, 4294901760
    %276 = vmatpush1.msra.mxu0 %v275
    %277 = vmatprep.subr.mxu0 0.0
    %v278 = vand.u32 %v28, 4294901760
    %v279 = vsub.f32 %v28, %v278
    %v280 = vand.u32 %v279, 4294901760
    %v281 = vsub.f32 %v279, %v280
    %v282 = vand.u32 %v281, 4294901760
    %283 = vmatpush1.msra.mxu0 %v282
    %284 = vmatprep.subr.mxu0 0.0
    %v285 = vand.u32 %v59, 4294901760
    %v286 = vsub.f32 %v59, %v285
    %v287 = vand.u32 %v286, 4294901760
    %v288 = vsub.f32 %v286, %v287
    %v289 = vand.u32 %v288, 4294901760
    %290 = vmatpush2.msra.mxu0 %v289
    %291 = vmatprep.subr.mxu0 0.0
    %v292 = vand.u32 %v58, 4294901760
    %v293 = vsub.f32 %v58, %v292
    %v294 = vand.u32 %v293, 4294901760
    %v295 = vsub.f32 %v293, %v294
    %v296 = vand.u32 %v295, 4294901760
    %297 = vmatpush2.msra.mxu0 %v296
    %298 = vmatprep.subr.mxu0 0.0
    %v299 = vand.u32 %v57, 4294901760
    %v300 = vsub.f32 %v57, %v299
    %v301 = vand.u32 %v300, 4294901760
    %v302 = vsub.f32 %v300, %v301
    %v303 = vand.u32 %v302, 4294901760
    %304 = vmatpush2.msra.mxu0 %v303
    %305 = vmatprep.subr.mxu0 0.0
    %v306 = vand.u32 %v56, 4294901760
    %v307 = vsub.f32 %v56, %v306
    %v308 = vand.u32 %v307, 4294901760
    %v309 = vsub.f32 %v307, %v308
    %v310 = vand.u32 %v309, 4294901760
    %311 = vmatpush2.msra.mxu0 %v310
    %312 = vmatprep.subr.mxu0 0.0
    %v313 = vand.u32 %v55, 4294901760
    %v314 = vsub.f32 %v55, %v313
    %v315 = vand.u32 %v314, 4294901760
    %v316 = vsub.f32 %v314, %v315
    %v317 = vand.u32 %v316, 4294901760
    %318 = vmatpush2.msra.mxu0 %v317
    %319 = vmatprep.subr.mxu0 0.0
    %v320 = vand.u32 %v54, 4294901760
    %v321 = vsub.f32 %v54, %v320
    %v322 = vand.u32 %v321, 4294901760
    %v323 = vsub.f32 %v321, %v322
    %v324 = vand.u32 %v323, 4294901760
    %325 = vmatpush2.msra.mxu0 %v324
    %326 = vmatprep.subr.mxu0 0.0
    %v327 = vand.u32 %v53, 4294901760
    %v328 = vsub.f32 %v53, %v327
    %v329 = vand.u32 %v328, 4294901760
    %v330 = vsub.f32 %v328, %v329
    %v331 = vand.u32 %v330, 4294901760
    %332 = vmatpush2.msra.mxu0 %v331
    %333 = vmatprep.subr.mxu0 0.0
    %v334 = vand.u32 %v52, 4294901760
    %v335 = vsub.f32 %v52, %v334
    %v336 = vand.u32 %v335, 4294901760
    %v337 = vsub.f32 %v335, %v336
    %v338 = vand.u32 %v337, 4294901760
    %339 = vmatpush2.msra.mxu0 %v338
    %340 = vmatprep.subr.mxu0 0.0
    %v341 = vand.u32 %v51, 4294901760
    %v342 = vsub.f32 %v51, %v341
    %v343 = vand.u32 %v342, 4294901760
    %v344 = vsub.f32 %v342, %v343
    %v345 = vand.u32 %v344, 4294901760
    %346 = vmatpush2.msra.mxu0 %v345
    %347 = vmatprep.subr.mxu0 0.0
    %v348 = vand.u32 %v50, 4294901760
    %v349 = vsub.f32 %v50, %v348
    %v350 = vand.u32 %v349, 4294901760
    %v351 = vsub.f32 %v349, %v350
    %v352 = vand.u32 %v351, 4294901760
    %353 = vmatpush2.msra.mxu0 %v352
    %354 = vmatprep.subr.mxu0 0.0
    %v355 = vand.u32 %v49, 4294901760
    %v356 = vsub.f32 %v49, %v355
    %v357 = vand.u32 %v356, 4294901760
    %v358 = vsub.f32 %v356, %v357
    %v359 = vand.u32 %v358, 4294901760
    %360 = vmatpush2.msra.mxu0 %v359
    %361 = vmatprep.subr.mxu0 0.0
    %v362 = vand.u32 %v48, 4294901760
    %v363 = vsub.f32 %v48, %v362
    %v364 = vand.u32 %v363, 4294901760
    %v365 = vsub.f32 %v363, %v364
    %v366 = vand.u32 %v365, 4294901760
    %367 = vmatpush2.msra.mxu0 %v366
    %368 = vmatprep.subr.mxu0 0.0
    %v369 = vand.u32 %v47, 4294901760
    %v370 = vsub.f32 %v47, %v369
    %v371 = vand.u32 %v370, 4294901760
    %v372 = vsub.f32 %v370, %v371
    %v373 = vand.u32 %v372, 4294901760
    %374 = vmatpush2.msra.mxu0 %v373
    %375 = vmatprep.subr.mxu0 0.0
    %v376 = vand.u32 %v46, 4294901760
    %v377 = vsub.f32 %v46, %v376
    %v378 = vand.u32 %v377, 4294901760
    %v379 = vsub.f32 %v377, %v378
    %v380 = vand.u32 %v379, 4294901760
    %381 = vmatpush2.msra.mxu0 %v380
    %382 = vmatprep.subr.mxu0 0.0
    %v383 = vand.u32 %v45, 4294901760
    %v384 = vsub.f32 %v45, %v383
    %v385 = vand.u32 %v384, 4294901760
    %v386 = vsub.f32 %v384, %v385
    %v387 = vand.u32 %v386, 4294901760
    %388 = vmatpush2.msra.mxu0 %v387
    %389 = vmatprep.subr.mxu0 0.0
    %v390 = vand.u32 %v44, 4294901760
    %v391 = vsub.f32 %v44, %v390
    %v392 = vand.u32 %v391, 4294901760
    %v393 = vsub.f32 %v391, %v392
    %v394 = vand.u32 %v393, 4294901760
    %395 = vmatpush2.msra.mxu0 %v394
    %v396 = vand.u32 %v27, 4294901760
    %397 = vmatprep.mubr.f32.mxu0 %v396
    %v398 = vand.u32 %v26, 4294901760
    %399 = vmatmul.mubr.f32.gmra.mxu0 %v398
    %v400 = vpop.f32.mrf.mxu0
    %v401 = vadd.f32 %v169, %v400
    %v402 = vpop.f32.mrf.mxu0
    %403 = vdwg.mxu0
    %404 = vmatprep.subr.mxu0 0.0
    %v405 = vand.u32 %v43, 4294901760
    %v406 = vsub.f32 %v43, %v405
    %407 = vmatpush1.msra.mxu0 %v406
    %408 = vmatprep.subr.mxu0 0.0
    %v409 = vand.u32 %v42, 4294901760
    %v410 = vsub.f32 %v42, %v409
    %411 = vmatpush1.msra.mxu0 %v410
    %412 = vmatprep.subr.mxu0 0.0
    %v413 = vand.u32 %v41, 4294901760
    %v414 = vsub.f32 %v41, %v413
    %415 = vmatpush1.msra.mxu0 %v414
    %416 = vmatprep.subr.mxu0 0.0
    %v417 = vand.u32 %v40, 4294901760
    %v418 = vsub.f32 %v40, %v417
    %419 = vmatpush1.msra.mxu0 %v418
    %420 = vmatprep.subr.mxu0 0.0
    %v421 = vand.u32 %v39, 4294901760
    %v422 = vsub.f32 %v39, %v421
    %423 = vmatpush1.msra.mxu0 %v422
    %424 = vmatprep.subr.mxu0 0.0
    %v425 = vand.u32 %v38, 4294901760
    %v426 = vsub.f32 %v38, %v425
    %427 = vmatpush1.msra.mxu0 %v426
    %428 = vmatprep.subr.mxu0 0.0
    %v429 = vand.u32 %v37, 4294901760
    %v430 = vsub.f32 %v37, %v429
    %431 = vmatpush1.msra.mxu0 %v430
    %432 = vmatprep.subr.mxu0 0.0
    %v433 = vand.u32 %v36, 4294901760
    %v434 = vsub.f32 %v36, %v433
    %435 = vmatpush1.msra.mxu0 %v434
    %436 = vmatprep.subr.mxu0 0.0
    %v437 = vand.u32 %v35, 4294901760
    %v438 = vsub.f32 %v35, %v437
    %439 = vmatpush1.msra.mxu0 %v438
    %440 = vmatprep.subr.mxu0 0.0
    %v441 = vand.u32 %v34, 4294901760
    %v442 = vsub.f32 %v34, %v441
    %443 = vmatpush1.msra.mxu0 %v442
    %444 = vmatprep.subr.mxu0 0.0
    %v445 = vand.u32 %v33, 4294901760
    %v446 = vsub.f32 %v33, %v445
    %447 = vmatpush1.msra.mxu0 %v446
    %448 = vmatprep.subr.mxu0 0.0
    %v449 = vand.u32 %v32, 4294901760
    %v450 = vsub.f32 %v32, %v449
    %451 = vmatpush1.msra.mxu0 %v450
    %452 = vmatprep.subr.mxu0 0.0
    %v453 = vand.u32 %v31, 4294901760
    %v454 = vsub.f32 %v31, %v453
    %455 = vmatpush1.msra.mxu0 %v454
    %456 = vmatprep.subr.mxu0 0.0
    %v457 = vand.u32 %v30, 4294901760
    %v458 = vsub.f32 %v30, %v457
    %459 = vmatpush1.msra.mxu0 %v458
    %460 = vmatprep.subr.mxu0 0.0
    %v461 = vand.u32 %v29, 4294901760
    %v462 = vsub.f32 %v29, %v461
    %463 = vmatpush1.msra.mxu0 %v462
    %464 = vmatprep.subr.mxu0 0.0
    %v465 = vand.u32 %v28, 4294901760
    %v466 = vsub.f32 %v28, %v465
    %467 = vmatpush1.msra.mxu0 %v466
    %468 = vmatprep.subr.mxu0 0.0
    %v469 = vand.u32 %v59, 4294901760
    %v470 = vsub.f32 %v59, %v469
    %471 = vmatpush2.msra.mxu0 %v470
    %472 = vmatprep.subr.mxu0 0.0
    %v473 = vand.u32 %v58, 4294901760
    %v474 = vsub.f32 %v58, %v473
    %475 = vmatpush2.msra.mxu0 %v474
    %476 = vmatprep.subr.mxu0 0.0
    %v477 = vand.u32 %v57, 4294901760
    %v478 = vsub.f32 %v57, %v477
    %479 = vmatpush2.msra.mxu0 %v478
    %480 = vmatprep.subr.mxu0 0.0
    %v481 = vand.u32 %v56, 4294901760
    %v482 = vsub.f32 %v56, %v481
    %483 = vmatpush2.msra.mxu0 %v482
    %484 = vmatprep.subr.mxu0 0.0
    %v485 = vand.u32 %v55, 4294901760
    %v486 = vsub.f32 %v55, %v485
    %487 = vmatpush2.msra.mxu0 %v486
    %488 = vmatprep.subr.mxu0 0.0
    %v489 = vand.u32 %v54, 4294901760
    %v490 = vsub.f32 %v54, %v489
    %491 = vmatpush2.msra.mxu0 %v490
    %492 = vmatprep.subr.mxu0 0.0
    %v493 = vand.u32 %v53, 4294901760
    %v494 = vsub.f32 %v53, %v493
    %495 = vmatpush2.msra.mxu0 %v494
    %496 = vmatprep.subr.mxu0 0.0
    %v497 = vand.u32 %v52, 4294901760
    %v498 = vsub.f32 %v52, %v497
    %499 = vmatpush2.msra.mxu0 %v498
    %500 = vmatprep.subr.mxu0 0.0
    %v501 = vand.u32 %v51, 4294901760
    %v502 = vsub.f32 %v51, %v501
    %503 = vmatpush2.msra.mxu0 %v502
    %504 = vmatprep.subr.mxu0 0.0
    %v505 = vand.u32 %v50, 4294901760
    %v506 = vsub.f32 %v50, %v505
    %507 = vmatpush2.msra.mxu0 %v506
    %508 = vmatprep.subr.mxu0 0.0
    %v509 = vand.u32 %v49, 4294901760
    %v510 = vsub.f32 %v49, %v509
    %511 = vmatpush2.msra.mxu0 %v510
    %512 = vmatprep.subr.mxu0 0.0
    %v513 = vand.u32 %v48, 4294901760
    %v514 = vsub.f32 %v48, %v513
    %515 = vmatpush2.msra.mxu0 %v514
    %516 = vmatprep.subr.mxu0 0.0
    %v517 = vand.u32 %v47, 4294901760
    %v518 = vsub.f32 %v47, %v517
    %519 = vmatpush2.msra.mxu0 %v518
    %520 = vmatprep.subr.mxu0 0.0
    %v521 = vand.u32 %v46, 4294901760
    %v522 = vsub.f32 %v46, %v521
    %523 = vmatpush2.msra.mxu0 %v522
    %524 = vmatprep.subr.mxu0 0.0
    %v525 = vand.u32 %v45, 4294901760
    %v526 = vsub.f32 %v45, %v525
    %527 = vmatpush2.msra.mxu0 %v526
    %528 = vmatprep.subr.mxu0 0.0
    %v529 = vand.u32 %v44, 4294901760
    %v530 = vsub.f32 %v44, %v529
    %531 = vmatpush2.msra.mxu0 %v530
    %v532 = vand.u32 %v27, 4294901760
    %v533 = vsub.f32 %v27, %v532
    %534 = vmatprep.mubr.f32.mxu0 %v533
    %v535 = vand.u32 %v26, 4294901760
    %v536 = vsub.f32 %v26, %v535
    %537 = vmatmul.mubr.f32.gmra.mxu0 %v536
    %v538 = vpop.f32.mrf.mxu0
    %v539 = vadd.f32 %v401, %v538
    %v540 = vpop.f32.mrf.mxu0
    %541 = vdwg.mxu0
    %542 = vmatprep.subr.mxu0 0.0
    %v543 = vand.u32 %v43, 4294901760
    %544 = vmatpush1.msra.mxu0 %v543
    %545 = vmatprep.subr.mxu0 0.0
    %v546 = vand.u32 %v42, 4294901760
    %547 = vmatpush1.msra.mxu0 %v546
    %548 = vmatprep.subr.mxu0 0.0
    %v549 = vand.u32 %v41, 4294901760
    %550 = vmatpush1.msra.mxu0 %v549
    %551 = vmatprep.subr.mxu0 0.0
    %v552 = vand.u32 %v40, 4294901760
    %553 = vmatpush1.msra.mxu0 %v552
    %554 = vmatprep.subr.mxu0 0.0
    %v555 = vand.u32 %v39, 4294901760
    %556 = vmatpush1.msra.mxu0 %v555
    %557 = vmatprep.subr.mxu0 0.0
    %v558 = vand.u32 %v38, 4294901760
    %559 = vmatpush1.msra.mxu0 %v558
    %560 = vmatprep.subr.mxu0 0.0
    %v561 = vand.u32 %v37, 4294901760
    %562 = vmatpush1.msra.mxu0 %v561
    %563 = vmatprep.subr.mxu0 0.0
    %v564 = vand.u32 %v36, 4294901760
    %565 = vmatpush1.msra.mxu0 %v564
    %566 = vmatprep.subr.mxu0 0.0
    %v567 = vand.u32 %v35, 4294901760
    %568 = vmatpush1.msra.mxu0 %v567
    %569 = vmatprep.subr.mxu0 0.0
    %v570 = vand.u32 %v34, 4294901760
    %571 = vmatpush1.msra.mxu0 %v570
    %572 = vmatprep.subr.mxu0 0.0
    %v573 = vand.u32 %v33, 4294901760
    %574 = vmatpush1.msra.mxu0 %v573
    %575 = vmatprep.subr.mxu0 0.0
    %v576 = vand.u32 %v32, 4294901760
    %577 = vmatpush1.msra.mxu0 %v576
    %578 = vmatprep.subr.mxu0 0.0
    %v579 = vand.u32 %v31, 4294901760
    %580 = vmatpush1.msra.mxu0 %v579
    %581 = vmatprep.subr.mxu0 0.0
    %v582 = vand.u32 %v30, 4294901760
    %583 = vmatpush1.msra.mxu0 %v582
    %584 = vmatprep.subr.mxu0 0.0
    %v585 = vand.u32 %v29, 4294901760
    %586 = vmatpush1.msra.mxu0 %v585
    %587 = vmatprep.subr.mxu0 0.0
    %v588 = vand.u32 %v28, 4294901760
    %589 = vmatpush1.msra.mxu0 %v588
    %590 = vmatprep.subr.mxu0 0.0
    %v591 = vand.u32 %v59, 4294901760
    %592 = vmatpush2.msra.mxu0 %v591
    %593 = vmatprep.subr.mxu0 0.0
    %v594 = vand.u32 %v58, 4294901760
    %595 = vmatpush2.msra.mxu0 %v594
    %596 = vmatprep.subr.mxu0 0.0
    %v597 = vand.u32 %v57, 4294901760
    %598 = vmatpush2.msra.mxu0 %v597
    %599 = vmatprep.subr.mxu0 0.0
    %v600 = vand.u32 %v56, 4294901760
    %601 = vmatpush2.msra.mxu0 %v600
    %602 = vmatprep.subr.mxu0 0.0
    %v603 = vand.u32 %v55, 4294901760
    %604 = vmatpush2.msra.mxu0 %v603
    %605 = vmatprep.subr.mxu0 0.0
    %v606 = vand.u32 %v54, 4294901760
    %607 = vmatpush2.msra.mxu0 %v606
    %608 = vmatprep.subr.mxu0 0.0
    %v609 = vand.u32 %v53, 4294901760
    %610 = vmatpush2.msra.mxu0 %v609
    %611 = vmatprep.subr.mxu0 0.0
    %v612 = vand.u32 %v52, 4294901760
    %613 = vmatpush2.msra.mxu0 %v612
    %614 = vmatprep.subr.mxu0 0.0
    %v615 = vand.u32 %v51, 4294901760
    %616 = vmatpush2.msra.mxu0 %v615
    %617 = vmatprep.subr.mxu0 0.0
    %v618 = vand.u32 %v50, 4294901760
    %619 = vmatpush2.msra.mxu0 %v618
    %620 = vmatprep.subr.mxu0 0.0
    %v621 = vand.u32 %v49, 4294901760
    %622 = vmatpush2.msra.mxu0 %v621
    %623 = vmatprep.subr.mxu0 0.0
    %v624 = vand.u32 %v48, 4294901760
    %625 = vmatpush2.msra.mxu0 %v624
    %626 = vmatprep.subr.mxu0 0.0
    %v627 = vand.u32 %v47, 4294901760
    %628 = vmatpush2.msra.mxu0 %v627
    %629 = vmatprep.subr.mxu0 0.0
    %v630 = vand.u32 %v46, 4294901760
    %631 = vmatpush2.msra.mxu0 %v630
    %632 = vmatprep.subr.mxu0 0.0
    %v633 = vand.u32 %v45, 4294901760
    %634 = vmatpush2.msra.mxu0 %v633
    %635 = vmatprep.subr.mxu0 0.0
    %v636 = vand.u32 %v44, 4294901760
    %637 = vmatpush2.msra.mxu0 %v636
    %v638 = vand.u32 %v27, 4294901760
    %v639 = vsub.f32 %v27, %v638
    %v640 = vand.u32 %v639, 4294901760
    %641 = vmatprep.mubr.f32.mxu0 %v640
    %v642 = vand.u32 %v26, 4294901760
    %v643 = vsub.f32 %v26, %v642
    %v644 = vand.u32 %v643, 4294901760
    %645 = vmatmul.mubr.f32.gmra.mxu0 %v644
    %v646 = vpop.f32.mrf.mxu0
    %v647 = vadd.f32 %v539, %v646
    %v648 = vpop.f32.mrf.mxu0
    %649 = vdwg.mxu0
    %650 = vmatprep.subr.mxu0 0.0
    %v651 = vand.u32 %v43, 4294901760
    %v652 = vsub.f32 %v43, %v651
    %v653 = vand.u32 %v652, 4294901760
    %654 = vmatpush1.msra.mxu0 %v653
    %655 = vmatprep.subr.mxu0 0.0
    %v656 = vand.u32 %v42, 4294901760
    %v657 = vsub.f32 %v42, %v656
    %v658 = vand.u32 %v657, 4294901760
    %659 = vmatpush1.msra.mxu0 %v658
    %660 = vmatprep.subr.mxu0 0.0
    %v661 = vand.u32 %v41, 4294901760
    %v662 = vsub.f32 %v41, %v661
    %v663 = vand.u32 %v662, 4294901760
    %664 = vmatpush1.msra.mxu0 %v663
    %665 = vmatprep.subr.mxu0 0.0
    %v666 = vand.u32 %v40, 4294901760
    %v667 = vsub.f32 %v40, %v666
    %v668 = vand.u32 %v667, 4294901760
    %669 = vmatpush1.msra.mxu0 %v668
    %670 = vmatprep.subr.mxu0 0.0
    %v671 = vand.u32 %v39, 4294901760
    %v672 = vsub.f32 %v39, %v671
    %v673 = vand.u32 %v672, 4294901760
    %674 = vmatpush1.msra.mxu0 %v673
    %675 = vmatprep.subr.mxu0 0.0
    %v676 = vand.u32 %v38, 4294901760
    %v677 = vsub.f32 %v38, %v676
    %v678 = vand.u32 %v677, 4294901760
    %679 = vmatpush1.msra.mxu0 %v678
    %680 = vmatprep.subr.mxu0 0.0
    %v681 = vand.u32 %v37, 4294901760
    %v682 = vsub.f32 %v37, %v681
    %v683 = vand.u32 %v682, 4294901760
    %684 = vmatpush1.msra.mxu0 %v683
    %685 = vmatprep.subr.mxu0 0.0
    %v686 = vand.u32 %v36, 4294901760
    %v687 = vsub.f32 %v36, %v686
    %v688 = vand.u32 %v687, 4294901760
    %689 = vmatpush1.msra.mxu0 %v688
    %690 = vmatprep.subr.mxu0 0.0
    %v691 = vand.u32 %v35, 4294901760
    %v692 = vsub.f32 %v35, %v691
    %v693 = vand.u32 %v692, 4294901760
    %694 = vmatpush1.msra.mxu0 %v693
    %695 = vmatprep.subr.mxu0 0.0
    %v696 = vand.u32 %v34, 4294901760
    %v697 = vsub.f32 %v34, %v696
    %v698 = vand.u32 %v697, 4294901760
    %699 = vmatpush1.msra.mxu0 %v698
    %700 = vmatprep.subr.mxu0 0.0
    %v701 = vand.u32 %v33, 4294901760
    %v702 = vsub.f32 %v33, %v701
    %v703 = vand.u32 %v702, 4294901760
    %704 = vmatpush1.msra.mxu0 %v703
    %705 = vmatprep.subr.mxu0 0.0
    %v706 = vand.u32 %v32, 4294901760
    %v707 = vsub.f32 %v32, %v706
    %v708 = vand.u32 %v707, 4294901760
    %709 = vmatpush1.msra.mxu0 %v708
    %710 = vmatprep.subr.mxu0 0.0
    %v711 = vand.u32 %v31, 4294901760
    %v712 = vsub.f32 %v31, %v711
    %v713 = vand.u32 %v712, 4294901760
    %714 = vmatpush1.msra.mxu0 %v713
    %715 = vmatprep.subr.mxu0 0.0
    %v716 = vand.u32 %v30, 4294901760
    %v717 = vsub.f32 %v30, %v716
    %v718 = vand.u32 %v717, 4294901760
    %719 = vmatpush1.msra.mxu0 %v718
    %720 = vmatprep.subr.mxu0 0.0
    %v721 = vand.u32 %v29, 4294901760
    %v722 = vsub.f32 %v29, %v721
    %v723 = vand.u32 %v722, 4294901760
    %724 = vmatpush1.msra.mxu0 %v723
    %725 = vmatprep.subr.mxu0 0.0
    %v726 = vand.u32 %v28, 4294901760
    %v727 = vsub.f32 %v28, %v726
    %v728 = vand.u32 %v727, 4294901760
    %729 = vmatpush1.msra.mxu0 %v728
    %730 = vmatprep.subr.mxu0 0.0
    %v731 = vand.u32 %v59, 4294901760
    %v732 = vsub.f32 %v59, %v731
    %v733 = vand.u32 %v732, 4294901760
    %734 = vmatpush2.msra.mxu0 %v733
    %735 = vmatprep.subr.mxu0 0.0
    %v736 = vand.u32 %v58, 4294901760
    %v737 = vsub.f32 %v58, %v736
    %v738 = vand.u32 %v737, 4294901760
    %739 = vmatpush2.msra.mxu0 %v738
    %740 = vmatprep.subr.mxu0 0.0
    %v741 = vand.u32 %v57, 4294901760
    %v742 = vsub.f32 %v57, %v741
    %v743 = vand.u32 %v742, 4294901760
    %744 = vmatpush2.msra.mxu0 %v743
    %745 = vmatprep.subr.mxu0 0.0
    %v746 = vand.u32 %v56, 4294901760
    %v747 = vsub.f32 %v56, %v746
    %v748 = vand.u32 %v747, 4294901760
    %749 = vmatpush2.msra.mxu0 %v748
    %750 = vmatprep.subr.mxu0 0.0
    %v751 = vand.u32 %v55, 4294901760
    %v752 = vsub.f32 %v55, %v751
    %v753 = vand.u32 %v752, 4294901760
    %754 = vmatpush2.msra.mxu0 %v753
    %755 = vmatprep.subr.mxu0 0.0
    %v756 = vand.u32 %v54, 4294901760
    %v757 = vsub.f32 %v54, %v756
    %v758 = vand.u32 %v757, 4294901760
    %759 = vmatpush2.msra.mxu0 %v758
    %760 = vmatprep.subr.mxu0 0.0
    %v761 = vand.u32 %v53, 4294901760
    %v762 = vsub.f32 %v53, %v761
    %v763 = vand.u32 %v762, 4294901760
    %764 = vmatpush2.msra.mxu0 %v763
    %765 = vmatprep.subr.mxu0 0.0
    %v766 = vand.u32 %v52, 4294901760
    %v767 = vsub.f32 %v52, %v766
    %v768 = vand.u32 %v767, 4294901760
    %769 = vmatpush2.msra.mxu0 %v768
    %770 = vmatprep.subr.mxu0 0.0
    %v771 = vand.u32 %v51, 4294901760
    %v772 = vsub.f32 %v51, %v771
    %v773 = vand.u32 %v772, 4294901760
    %774 = vmatpush2.msra.mxu0 %v773
    %775 = vmatprep.subr.mxu0 0.0
    %v776 = vand.u32 %v50, 4294901760
    %v777 = vsub.f32 %v50, %v776
    %v778 = vand.u32 %v777, 4294901760
    %779 = vmatpush2.msra.mxu0 %v778
    %780 = vmatprep.subr.mxu0 0.0
    %v781 = vand.u32 %v49, 4294901760
    %v782 = vsub.f32 %v49, %v781
    %v783 = vand.u32 %v782, 4294901760
    %784 = vmatpush2.msra.mxu0 %v783
    %785 = vmatprep.subr.mxu0 0.0
    %v786 = vand.u32 %v48, 4294901760
    %v787 = vsub.f32 %v48, %v786
    %v788 = vand.u32 %v787, 4294901760
    %789 = vmatpush2.msra.mxu0 %v788
    %790 = vmatprep.subr.mxu0 0.0
    %v791 = vand.u32 %v47, 4294901760
    %v792 = vsub.f32 %v47, %v791
    %v793 = vand.u32 %v792, 4294901760
    %794 = vmatpush2.msra.mxu0 %v793
    %795 = vmatprep.subr.mxu0 0.0
    %v796 = vand.u32 %v46, 4294901760
    %v797 = vsub.f32 %v46, %v796
    %v798 = vand.u32 %v797, 4294901760
    %799 = vmatpush2.msra.mxu0 %v798
    %800 = vmatprep.subr.mxu0 0.0
    %v801 = vand.u32 %v45, 4294901760
    %v802 = vsub.f32 %v45, %v801
    %v803 = vand.u32 %v802, 4294901760
    %804 = vmatpush2.msra.mxu0 %v803
    %805 = vmatprep.subr.mxu0 0.0
    %v806 = vand.u32 %v44, 4294901760
    %v807 = vsub.f32 %v44, %v806
    %v808 = vand.u32 %v807, 4294901760
    %809 = vmatpush2.msra.mxu0 %v808
    %v810 = vand.u32 %v27, 4294901760
    %811 = vmatprep.mubr.f32.mxu0 %v810
    %v812 = vand.u32 %v26, 4294901760
    %813 = vmatmul.mubr.f32.gmra.mxu0 %v812
    %v814 = vpop.f32.mrf.mxu0
    %v815 = vadd.f32 %v647, %v814
    %v816 = vpop.f32.mrf.mxu0
    %817 = vdwg.mxu0
    %818 = vmatprep.subr.mxu0 0.0
    %v819 = vand.u32 %v43, 4294901760
    %820 = vmatpush1.msra.mxu0 %v819
    %821 = vmatprep.subr.mxu0 0.0
    %v822 = vand.u32 %v42, 4294901760
    %823 = vmatpush1.msra.mxu0 %v822
    %824 = vmatprep.subr.mxu0 0.0
    %v825 = vand.u32 %v41, 4294901760
    %826 = vmatpush1.msra.mxu0 %v825
    %827 = vmatprep.subr.mxu0 0.0
    %v828 = vand.u32 %v40, 4294901760
    %829 = vmatpush1.msra.mxu0 %v828
    %830 = vmatprep.subr.mxu0 0.0
    %v831 = vand.u32 %v39, 4294901760
    %832 = vmatpush1.msra.mxu0 %v831
    %833 = vmatprep.subr.mxu0 0.0
    %v834 = vand.u32 %v38, 4294901760
    %835 = vmatpush1.msra.mxu0 %v834
    %836 = vmatprep.subr.mxu0 0.0
    %v837 = vand.u32 %v37, 4294901760
    %838 = vmatpush1.msra.mxu0 %v837
    %839 = vmatprep.subr.mxu0 0.0
    %v840 = vand.u32 %v36, 4294901760
    %841 = vmatpush1.msra.mxu0 %v840
    %842 = vmatprep.subr.mxu0 0.0
    %v843 = vand.u32 %v35, 4294901760
    %844 = vmatpush1.msra.mxu0 %v843
    %845 = vmatprep.subr.mxu0 0.0
    %v846 = vand.u32 %v34, 4294901760
    %847 = vmatpush1.msra.mxu0 %v846
    %848 = vmatprep.subr.mxu0 0.0
    %v849 = vand.u32 %v33, 4294901760
    %850 = vmatpush1.msra.mxu0 %v849
    %851 = vmatprep.subr.mxu0 0.0
    %v852 = vand.u32 %v32, 4294901760
    %853 = vmatpush1.msra.mxu0 %v852
    %854 = vmatprep.subr.mxu0 0.0
    %v855 = vand.u32 %v31, 4294901760
    %856 = vmatpush1.msra.mxu0 %v855
    %857 = vmatprep.subr.mxu0 0.0
    %v858 = vand.u32 %v30, 4294901760
    %859 = vmatpush1.msra.mxu0 %v858
    %860 = vmatprep.subr.mxu0 0.0
    %v861 = vand.u32 %v29, 4294901760
    %862 = vmatpush1.msra.mxu0 %v861
    %863 = vmatprep.subr.mxu0 0.0
    %v864 = vand.u32 %v28, 4294901760
    %865 = vmatpush1.msra.mxu0 %v864
    %866 = vmatprep.subr.mxu0 0.0
    %v867 = vand.u32 %v59, 4294901760
    %868 = vmatpush2.msra.mxu0 %v867
    %869 = vmatprep.subr.mxu0 0.0
    %v870 = vand.u32 %v58, 4294901760
    %871 = vmatpush2.msra.mxu0 %v870
    %872 = vmatprep.subr.mxu0 0.0
    %v873 = vand.u32 %v57, 4294901760
    %874 = vmatpush2.msra.mxu0 %v873
    %875 = vmatprep.subr.mxu0 0.0
    %v876 = vand.u32 %v56, 4294901760
    %877 = vmatpush2.msra.mxu0 %v876
    %878 = vmatprep.subr.mxu0 0.0
    %v879 = vand.u32 %v55, 4294901760
    %880 = vmatpush2.msra.mxu0 %v879
    %881 = vmatprep.subr.mxu0 0.0
    %v882 = vand.u32 %v54, 4294901760
    %883 = vmatpush2.msra.mxu0 %v882
    %884 = vmatprep.subr.mxu0 0.0
    %v885 = vand.u32 %v53, 4294901760
    %886 = vmatpush2.msra.mxu0 %v885
    %887 = vmatprep.subr.mxu0 0.0
    %v888 = vand.u32 %v52, 4294901760
    %889 = vmatpush2.msra.mxu0 %v888
    %890 = vmatprep.subr.mxu0 0.0
    %v891 = vand.u32 %v51, 4294901760
    %892 = vmatpush2.msra.mxu0 %v891
    %893 = vmatprep.subr.mxu0 0.0
    %v894 = vand.u32 %v50, 4294901760
    %895 = vmatpush2.msra.mxu0 %v894
    %896 = vmatprep.subr.mxu0 0.0
    %v897 = vand.u32 %v49, 4294901760
    %898 = vmatpush2.msra.mxu0 %v897
    %899 = vmatprep.subr.mxu0 0.0
    %v900 = vand.u32 %v48, 4294901760
    %901 = vmatpush2.msra.mxu0 %v900
    %902 = vmatprep.subr.mxu0 0.0
    %v903 = vand.u32 %v47, 4294901760
    %904 = vmatpush2.msra.mxu0 %v903
    %905 = vmatprep.subr.mxu0 0.0
    %v906 = vand.u32 %v46, 4294901760
    %907 = vmatpush2.msra.mxu0 %v906
    %908 = vmatprep.subr.mxu0 0.0
    %v909 = vand.u32 %v45, 4294901760
    %910 = vmatpush2.msra.mxu0 %v909
    %911 = vmatprep.subr.mxu0 0.0
    %v912 = vand.u32 %v44, 4294901760
    %913 = vmatpush2.msra.mxu0 %v912
    %v914 = vand.u32 %v27, 4294901760
    %915 = vmatprep.mubr.f32.mxu0 %v914
    %v916 = vand.u32 %v26, 4294901760
    %917 = vmatmul.mubr.f32.gmra.mxu0 %v916
    %v918 = vpop.f32.mrf.mxu0
    %v919 = vadd.f32 %v815, %v918
    %v920 = vpop.f32.mrf.mxu0
    %921 = vdwg.mxu0
    %922 = vst [vmem:[#allocation5] sm:$0xff] %v919
    // Predicated region
    $region14: #{_forward_impl.1} parent=1 // pred_check
      _
    $region15: #{_forward_impl.1} parent=1 // pred_check_branch
      %924 = sbr.rel (0) target = $region17
    $region16: #{_forward_impl.1} parent=1 // pred_region
      %s926 = ssub.s32 128, 128
      %927 = vsyncadd [#allocation4], %s926
      %s929 = sshll.u32 [#allocation5], 4
      %s930 = int_to_ptr.vmem [resolvable:$true] %s929
      %932 = dma.vmem_to_hbm [thread:$0]  %s930, 128, %s2, [#allocation4]
    $region17: #{_forward_impl.1} parent=1 // pred_fallthru
      _
    // Predicated region
    $region18: #{_forward_impl.1} parent=1 // pred_check
      _
    $region19: #{_forward_impl.1} parent=1 // pred_check_branch
      %934 = sbr.rel (0) target = $region21
    $region20: #{_forward_impl.1} parent=1 // pred_region
      %935 = dma.done [#allocation4], 128
    $region21: #{_forward_impl.1} parent=1 // pred_fallthru
      _
    %936 = vsyncpa [#allocation3], 1
    %937 = vsyncpa [#allocation4], 1

// kernel: _forward_impl.1
$region0: #{_forward_impl.1}
  #allocation0 [shape = 'u32[]', space=smem, size = 0x4, offset = 0x4, fixed_abs, tag = 'smem constant byte address 0x4 - core index']
  #allocation1 [shape = 'u32[144,128]{1,0:T(1,128)}', space=vmem, size = 0x12000, scoped, tag = 'internal scratch']
  %s0 = inlined_call_operand.vmem [shape: f32[8,256], index: 0, kind: input, shape index: {}]
  %s1 = inlined_call_operand.hbm [shape: f32[256,128], index: 1, kind: input, shape index: {}]
  %s2 = inlined_call_operand.hbm [shape: f32[8,128], index: 2, kind: output, shape index: {}]
  %s3 = sld [smem:[#allocation0]]
  $region22: #{_forward_impl.1} parent=0
    _
  %s5 = ssub.s32 1, %s3
  %s6 = scalar_select 0, %s5, %s3
  $region1: #{_forward_impl.1} parent=0
    #allocation2 [shape = 'u8[131072]{0}', space=vmem, size = 0x20000, scoped, tag = 'input window, operand 1, single buffered']
    #allocation3 [shape = 's32[1]{0}', space=sflag, size = 0x4, scoped, tag = 'scoped memory for _forward_impl.1']
    #allocation4 [shape = 's32[1]{0}', space=sflag, size = 0x4, scoped, tag = 'scoped memory for _forward_impl.1']
    #allocation5 [shape = 'u8[4096]{0}', space=vmem, size = 0x1000, scoped, tag = 'output window, operand 0, single buffered']
    %7 = vsyncpa [#allocation3], 0
    %8 = vsyncpa [#allocation4], 0
    // Predicated region
    $region2: #{_forward_impl.1} parent=1 // pred_check
      _
    $region3: #{_forward_impl.1} parent=1 // pred_check_branch
      %10 = sbr.rel (0) target = $region5
    $region4: #{_forward_impl.1} parent=1 // pred_region
      _
    $region5: #{_forward_impl.1} parent=1 // pred_fallthru
      _
    // Predicated region
    $region6: #{_forward_impl.1} parent=1 // pred_check
      _
    $region7: #{_forward_impl.1} parent=1 // pred_check_branch
      %12 = sbr.rel (0) target = $region9
    $region8: #{_forward_impl.1} parent=1 // pred_region
      %s14 = ssub.s32 4096, 4096
      %15 = vsyncadd [#allocation3], %s14
      %s16 = sshll.u32 [#allocation2], 4
      %s17 = int_to_ptr.vmem [resolvable:$true] %s16
      %22 = dma.hbm_to_vmem [thread:$0]  %s1, 4096, %s17, [#allocation3], 128, 128, 8
    $region9: #{_forward_impl.1} parent=1 // pred_fallthru
      _
    // Predicated region
    $region10: #{_forward_impl.1} parent=1 // pred_check
      _
    $region11: #{_forward_impl.1} parent=1 // pred_check_branch
      %24 = sbr.rel (0) target = $region13
    $region12: #{_forward_impl.1} parent=1 // pred_region
      %25 = dma.done [#allocation3], 4096
    $region13: #{_forward_impl.1} parent=1 // pred_fallthru
      _
    %v26 = vld [vmem:[%s0] sm:$0xff]
    %v27 = vld [vmem:[%s0 + $0x8] sm:$0xff]
    %v28 = vld [vmem:[#allocation2] sm:$0xff]
    %v29 = vld [vmem:[#allocation2 + $0x8] sm:$0xff]
    %v30 = vld [vmem:[#allocation2 + $0x10] sm:$0xff]
    %v31 = vld [vmem:[#allocation2 + $0x18] sm:$0xff]
    %v32 = vld [vmem:[#allocation2 + $0x20] sm:$0xff]
    %v33 = vld [vmem:[#allocation2 + $0x28] sm:$0xff]
    %v34 = vld [vmem:[#allocation2 + $0x30] sm:$0xff]
    %v35 = vld [vmem:[#allocation2 + $0x38] sm:$0xff]
    %v36 = vld [vmem:[#allocation2 + $0x40] sm:$0xff]
    %v37 = vld [vmem:[#allocation2 + $0x48] sm:$0xff]
    %v38 = vld [vmem:[#allocation2 + $0x50] sm:$0xff]
    %v39 = vld [vmem:[#allocation2 + $0x58] sm:$0xff]
    %v40 = vld [vmem:[#allocation2 + $0x60] sm:$0xff]
    %v41 = vld [vmem:[#allocation2 + $0x68] sm:$0xff]
    %v42 = vld [vmem:[#allocation2 + $0x70] sm:$0xff]
    %v43 = vld [vmem:[#allocation2 + $0x78] sm:$0xff]
    %v44 = vld [vmem:[#allocation2 + $0x80] sm:$0xff]
    %v45 = vld [vmem:[#allocation2 + $0x88] sm:$0xff]
    %v46 = vld [vmem:[#allocation2 + $0x90] sm:$0xff]
    %v47 = vld [vmem:[#allocation2 + $0x98] sm:$0xff]
    %v48 = vld [vmem:[#allocation2 + $0xa0] sm:$0xff]
    %v49 = vld [vmem:[#allocation2 + $0xa8] sm:$0xff]
    %v50 = vld [vmem:[#allocation2 + $0xb0] sm:$0xff]
    %v51 = vld [vmem:[#allocation2 + $0xb8] sm:$0xff]
    %v52 = vld [vmem:[#allocation2 + $0xc0] sm:$0xff]
    %v53 = vld [vmem:[#allocation2 + $0xc8] sm:$0xff]
    %v54 = vld [vmem:[#allocation2 + $0xd0] sm:$0xff]
    %v55 = vld [vmem:[#allocation2 + $0xd8] sm:$0xff]
    %v56 = vld [vmem:[#allocation2 + $0xe0] sm:$0xff]
    %v57 = vld [vmem:[#allocation2 + $0xe8] sm:$0xff]
    %v58 = vld [vmem:[#allocation2 + $0xf0] sm:$0xff]
    %v59 = vld [vmem:[#allocation2 + $0xf8] sm:$0xff]
    %60 = vmatprep.subr.mxu0 0.0
    %v61 = vand.u32 %v43, 4294901760
    %62 = vmatpush1.msra.mxu0 %v61
    %63 = vmatprep.subr.mxu0 0.0
    %v64 = vand.u32 %v42, 4294901760
    %65 = vmatpush1.msra.mxu0 %v64
    %66 = vmatprep.subr.mxu0 0.0
    %v67 = vand.u32 %v41, 4294901760
    %68 = vmatpush1.msra.mxu0 %v67
    %69 = vmatprep.subr.mxu0 0.0
    %v70 = vand.u32 %v40, 4294901760
    %71 = vmatpush1.msra.mxu0 %v70
    %72 = vmatprep.subr.mxu0 0.0
    %v73 = vand.u32 %v39, 4294901760
    %74 = vmatpush1.msra.mxu0 %v73
    %75 = vmatprep.subr.mxu0 0.0
    %v76 = vand.u32 %v38, 4294901760
    %77 = vmatpush1.msra.mxu0 %v76
    %78 = vmatprep.subr.mxu0 0.0
    %v79 = vand.u32 %v37, 4294901760
    %80 = vmatpush1.msra.mxu0 %v79
    %81 = vmatprep.subr.mxu0 0.0
    %v82 = vand.u32 %v36, 4294901760
    %83 = vmatpush1.msra.mxu0 %v82
    %84 = vmatprep.subr.mxu0 0.0
    %v85 = vand.u32 %v35, 4294901760
    %86 = vmatpush1.msra.mxu0 %v85
    %87 = vmatprep.subr.mxu0 0.0
    %v88 = vand.u32 %v34, 4294901760
    %89 = vmatpush1.msra.mxu0 %v88
    %90 = vmatprep.subr.mxu0 0.0
    %v91 = vand.u32 %v33, 4294901760
    %92 = vmatpush1.msra.mxu0 %v91
    %93 = vmatprep.subr.mxu0 0.0
    %v94 = vand.u32 %v32, 4294901760
    %95 = vmatpush1.msra.mxu0 %v94
    %96 = vmatprep.subr.mxu0 0.0
    %v97 = vand.u32 %v31, 4294901760
    %98 = vmatpush1.msra.mxu0 %v97
    %99 = vmatprep.subr.mxu0 0.0
    %v100 = vand.u32 %v30, 4294901760
    %101 = vmatpush1.msra.mxu0 %v100
    %102 = vmatprep.subr.mxu0 0.0
    %v103 = vand.u32 %v29, 4294901760
    %104 = vmatpush1.msra.mxu0 %v103
    %105 = vmatprep.subr.mxu0 0.0
    %v106 = vand.u32 %v28, 4294901760
    %107 = vmatpush1.msra.mxu0 %v106
    %108 = vmatprep.subr.mxu0 0.0
    %v109 = vand.u32 %v59, 4294901760
    %110 = vmatpush2.msra.mxu0 %v109
    %111 = vmatprep.subr.mxu0 0.0
    %v112 = vand.u32 %v58, 4294901760
    %113 = vmatpush2.msra.mxu0 %v112
    %114 = vmatprep.subr.mxu0 0.0
    %v115 = vand.u32 %v57, 4294901760
    %116 = vmatpush2.msra.mxu0 %v115
    %117 = vmatprep.subr.mxu0 0.0
    %v118 = vand.u32 %v56, 4294901760
    %119 = vmatpush2.msra.mxu0 %v118
    %120 = vmatprep.subr.mxu0 0.0
    %v121 = vand.u32 %v55, 4294901760
    %122 = vmatpush2.msra.mxu0 %v121
    %123 = vmatprep.subr.mxu0 0.0
    %v124 = vand.u32 %v54, 4294901760
    %125 = vmatpush2.msra.mxu0 %v124
    %126 = vmatprep.subr.mxu0 0.0
    %v127 = vand.u32 %v53, 4294901760
    %128 = vmatpush2.msra.mxu0 %v127
    %129 = vmatprep.subr.mxu0 0.0
    %v130 = vand.u32 %v52, 4294901760
    %131 = vmatpush2.msra.mxu0 %v130
    %132 = vmatprep.subr.mxu0 0.0
    %v133 = vand.u32 %v51, 4294901760
    %134 = vmatpush2.msra.mxu0 %v133
    %135 = vmatprep.subr.mxu0 0.0
    %v136 = vand.u32 %v50, 4294901760
    %137 = vmatpush2.msra.mxu0 %v136
    %138 = vmatprep.subr.mxu0 0.0
    %v139 = vand.u32 %v49, 4294901760
    %140 = vmatpush2.msra.mxu0 %v139
    %141 = vmatprep.subr.mxu0 0.0
    %v142 = vand.u32 %v48, 4294901760
    %143 = vmatpush2.msra.mxu0 %v142
    %144 = vmatprep.subr.mxu0 0.0
    %v145 = vand.u32 %v47, 4294901760
    %146 = vmatpush2.msra.mxu0 %v145
    %147 = vmatprep.subr.mxu0 0.0
    %v148 = vand.u32 %v46, 4294901760
    %149 = vmatpush2.msra.mxu0 %v148
    %150 = vmatprep.subr.mxu0 0.0
    %v151 = vand.u32 %v45, 4294901760
    %152 = vmatpush2.msra.mxu0 %v151
    %153 = vmatprep.subr.mxu0 0.0
    %v154 = vand.u32 %v44, 4294901760
    %155 = vmatpush2.msra.mxu0 %v154
    %v156 = vand.u32 %v27, 4294901760
    %v157 = vsub.f32 %v27, %v156
    %v158 = vand.u32 %v157, 4294901760
    %v159 = vsub.f32 %v157, %v158
    %v160 = vand.u32 %v159, 4294901760
    %161 = vmatprep.mubr.f32.mxu0 %v160
    %v162 = vand.u32 %v26, 4294901760
    %v163 = vsub.f32 %v26, %v162
    %v164 = vand.u32 %v163, 4294901760
    %v165 = vsub.f32 %v163, %v164
    %v166 = vand.u32 %v165, 4294901760
    %167 = vmatmul.mubr.f32.gmra.mxu0 %v166
    %v168 = vpop.f32.mrf.mxu0
    %v169 = vadd.f32 0.0, %v168
    %v170 = vpop.f32.mrf.mxu0
    %171 = vdwg.mxu0
    %172 = vmatprep.subr.mxu0 0.0
    %v173 = vand.u32 %v43, 4294901760
    %v174 = vsub.f32 %v43, %v173
    %v175 = vand.u32 %v174, 4294901760
    %v176 = vsub.f32 %v174, %v175
    %v177 = vand.u32 %v176, 4294901760
    %178 = vmatpush1.msra.mxu0 %v177
    %179 = vmatprep.subr.mxu0 0.0
    %v180 = vand.u32 %v42, 4294901760
    %v181 = vsub.f32 %v42, %v180
    %v182 = vand.u32 %v181, 4294901760
    %v183 = vsub.f32 %v181, %v182
    %v184 = vand.u32 %v183, 4294901760
    %185 = vmatpush1.msra.mxu0 %v184
    %186 = vmatprep.subr.mxu0 0.0
    %v187 = vand.u32 %v41, 4294901760
    %v188 = vsub.f32 %v41, %v187
    %v189 = vand.u32 %v188, 4294901760
    %v190 = vsub.f32 %v188, %v189
    %v191 = vand.u32 %v190, 4294901760
    %192 = vmatpush1.msra.mxu0 %v191
    %193 = vmatprep.subr.mxu0 0.0
    %v194 = vand.u32 %v40, 4294901760
    %v195 = vsub.f32 %v40, %v194
    %v196 = vand.u32 %v195, 4294901760
    %v197 = vsub.f32 %v195, %v196
    %v198 = vand.u32 %v197, 4294901760
    %199 = vmatpush1.msra.mxu0 %v198
    %200 = vmatprep.subr.mxu0 0.0
    %v201 = vand.u32 %v39, 4294901760
    %v202 = vsub.f32 %v39, %v201
    %v203 = vand.u32 %v202, 4294901760
    %v204 = vsub.f32 %v202, %v203
    %v205 = vand.u32 %v204, 4294901760
    %206 = vmatpush1.msra.mxu0 %v205
    %207 = vmatprep.subr.mxu0 0.0
    %v208 = vand.u32 %v38, 4294901760
    %v209 = vsub.f32 %v38, %v208
    %v210 = vand.u32 %v209, 4294901760
    %v211 = vsub.f32 %v209, %v210
    %v212 = vand.u32 %v211, 4294901760
    %213 = vmatpush1.msra.mxu0 %v212
    %214 = vmatprep.subr.mxu0 0.0
    %v215 = vand.u32 %v37, 4294901760
    %v216 = vsub.f32 %v37, %v215
    %v217 = vand.u32 %v216, 4294901760
    %v218 = vsub.f32 %v216, %v217
    %v219 = vand.u32 %v218, 4294901760
    %220 = vmatpush1.msra.mxu0 %v219
    %221 = vmatprep.subr.mxu0 0.0
    %v222 = vand.u32 %v36, 4294901760
    %v223 = vsub.f32 %v36, %v222
    %v224 = vand.u32 %v223, 4294901760
    %v225 = vsub.f32 %v223, %v224
    %v226 = vand.u32 %v225, 4294901760
    %227 = vmatpush1.msra.mxu0 %v226
    %228 = vmatprep.subr.mxu0 0.0
    %v229 = vand.u32 %v35, 4294901760
    %v230 = vsub.f32 %v35, %v229
    %v231 = vand.u32 %v230, 4294901760
    %v232 = vsub.f32 %v230, %v231
    %v233 = vand.u32 %v232, 4294901760
    %234 = vmatpush1.msra.mxu0 %v233
    %235 = vmatprep.subr.mxu0 0.0
    %v236 = vand.u32 %v34, 4294901760
    %v237 = vsub.f32 %v34, %v236
    %v238 = vand.u32 %v237, 4294901760
    %v239 = vsub.f32 %v237, %v238
    %v240 = vand.u32 %v239, 4294901760
    %241 = vmatpush1.msra.mxu0 %v240
    %242 = vmatprep.subr.mxu0 0.0
    %v243 = vand.u32 %v33, 4294901760
    %v244 = vsub.f32 %v33, %v243
    %v245 = vand.u32 %v244, 4294901760
    %v246 = vsub.f32 %v244, %v245
    %v247 = vand.u32 %v246, 4294901760
    %248 = vmatpush1.msra.mxu0 %v247
    %249 = vmatprep.subr.mxu0 0.0
    %v250 = vand.u32 %v32, 4294901760
    %v251 = vsub.f32 %v32, %v250
    %v252 = vand.u32 %v251, 4294901760
    %v253 = vsub.f32 %v251, %v252
    %v254 = vand.u32 %v253, 4294901760
    %255 = vmatpush1.msra.mxu0 %v254
    %256 = vmatprep.subr.mxu0 0.0
    %v257 = vand.u32 %v31, 4294901760
    %v258 = vsub.f32 %v31, %v257
    %v259 = vand.u32 %v258, 4294901760
    %v260 = vsub.f32 %v258, %v259
    %v261 = vand.u32 %v260, 4294901760
    %262 = vmatpush1.msra.mxu0 %v261
    %263 = vmatprep.subr.mxu0 0.0
    %v264 = vand.u32 %v30, 4294901760
    %v265 = vsub.f32 %v30, %v264
    %v266 = vand.u32 %v265, 4294901760
    %v267 = vsub.f32 %v265, %v266
    %v268 = vand.u32 %v267, 4294901760
    %269 = vmatpush1.msra.mxu0 %v268
    %270 = vmatprep.subr.mxu0 0.0
    %v271 = vand.u32 %v29, 4294901760
    %v272 = vsub.f32 %v29, %v271
    %v273 = vand.u32 %v272, 4294901760
    %v274 = vsub.f32 %v272, %v273
    %v275 = vand.u32 %v274, 4294901760
    %276 = vmatpush1.msra.mxu0 %v275
    %277 = vmatprep.subr.mxu0 0.0
    %v278 = vand.u32 %v28, 4294901760
    %v279 = vsub.f32 %v28, %v278
    %v280 = vand.u32 %v279, 4294901760
    %v281 = vsub.f32 %v279, %v280
    %v282 = vand.u32 %v281, 4294901760
    %283 = vmatpush1.msra.mxu0 %v282
    %284 = vmatprep.subr.mxu0 0.0
    %v285 = vand.u32 %v59, 4294901760
    %v286 = vsub.f32 %v59, %v285
    %v287 = vand.u32 %v286, 4294901760
    %v288 = vsub.f32 %v286, %v287
    %v289 = vand.u32 %v288, 4294901760
    %290 = vmatpush2.msra.mxu0 %v289
    %291 = vmatprep.subr.mxu0 0.0
    %v292 = vand.u32 %v58, 4294901760
    %v293 = vsub.f32 %v58, %v292
    %v294 = vand.u32 %v293, 4294901760
    %v295 = vsub.f32 %v293, %v294
    %v296 = vand.u32 %v295, 4294901760
    %297 = vmatpush2.msra.mxu0 %v296
    %298 = vmatprep.subr.mxu0 0.0
    %v299 = vand.u32 %v57, 4294901760
    %v300 = vsub.f32 %v57, %v299
    %v301 = vand.u32 %v300, 4294901760
    %v302 = vsub.f32 %v300, %v301
    %v303 = vand.u32 %v302, 4294901760
    %304 = vmatpush2.msra.mxu0 %v303
    %305 = vmatprep.subr.mxu0 0.0
    %v306 = vand.u32 %v56, 4294901760
    %v307 = vsub.f32 %v56, %v306
    %v308 = vand.u32 %v307, 4294901760
    %v309 = vsub.f32 %v307, %v308
    %v310 = vand.u32 %v309, 4294901760
    %311 = vmatpush2.msra.mxu0 %v310
    %312 = vmatprep.subr.mxu0 0.0
    %v313 = vand.u32 %v55, 4294901760
    %v314 = vsub.f32 %v55, %v313
    %v315 = vand.u32 %v314, 4294901760
    %v316 = vsub.f32 %v314, %v315
    %v317 = vand.u32 %v316, 4294901760
    %318 = vmatpush2.msra.mxu0 %v317
    %319 = vmatprep.subr.mxu0 0.0
    %v320 = vand.u32 %v54, 4294901760
    %v321 = vsub.f32 %v54, %v320
    %v322 = vand.u32 %v321, 4294901760
    %v323 = vsub.f32 %v321, %v322
    %v324 = vand.u32 %v323, 4294901760
    %325 = vmatpush2.msra.mxu0 %v324
    %326 = vmatprep.subr.mxu0 0.0
    %v327 = vand.u32 %v53, 4294901760
    %v328 = vsub.f32 %v53, %v327
    %v329 = vand.u32 %v328, 4294901760
    %v330 = vsub.f32 %v328, %v329
    %v331 = vand.u32 %v330, 4294901760
    %332 = vmatpush2.msra.mxu0 %v331
    %333 = vmatprep.subr.mxu0 0.0
    %v334 = vand.u32 %v52, 4294901760
    %v335 = vsub.f32 %v52, %v334
    %v336 = vand.u32 %v335, 4294901760
    %v337 = vsub.f32 %v335, %v336
    %v338 = vand.u32 %v337, 4294901760
    %339 = vmatpush2.msra.mxu0 %v338
    %340 = vmatprep.subr.mxu0 0.0
    %v341 = vand.u32 %v51, 4294901760
    %v342 = vsub.f32 %v51, %v341
    %v343 = vand.u32 %v342, 4294901760
    %v344 = vsub.f32 %v342, %v343
    %v345 = vand.u32 %v344, 4294901760
    %346 = vmatpush2.msra.mxu0 %v345
    %347 = vmatprep.subr.mxu0 0.0
    %v348 = vand.u32 %v50, 4294901760
    %v349 = vsub.f32 %v50, %v348
    %v350 = vand.u32 %v349, 4294901760
    %v351 = vsub.f32 %v349, %v350
    %v352 = vand.u32 %v351, 4294901760
    %353 = vmatpush2.msra.mxu0 %v352
    %354 = vmatprep.subr.mxu0 0.0
    %v355 = vand.u32 %v49, 4294901760
    %v356 = vsub.f32 %v49, %v355
    %v357 = vand.u32 %v356, 4294901760
    %v358 = vsub.f32 %v356, %v357
    %v359 = vand.u32 %v358, 4294901760
    %360 = vmatpush2.msra.mxu0 %v359
    %361 = vmatprep.subr.mxu0 0.0
    %v362 = vand.u32 %v48, 4294901760
    %v363 = vsub.f32 %v48, %v362
    %v364 = vand.u32 %v363, 4294901760
    %v365 = vsub.f32 %v363, %v364
    %v366 = vand.u32 %v365, 4294901760
    %367 = vmatpush2.msra.mxu0 %v366
    %368 = vmatprep.subr.mxu0 0.0
    %v369 = vand.u32 %v47, 4294901760
    %v370 = vsub.f32 %v47, %v369
    %v371 = vand.u32 %v370, 4294901760
    %v372 = vsub.f32 %v370, %v371
    %v373 = vand.u32 %v372, 4294901760
    %374 = vmatpush2.msra.mxu0 %v373
    %375 = vmatprep.subr.mxu0 0.0
    %v376 = vand.u32 %v46, 4294901760
    %v377 = vsub.f32 %v46, %v376
    %v378 = vand.u32 %v377, 4294901760
    %v379 = vsub.f32 %v377, %v378
    %v380 = vand.u32 %v379, 4294901760
    %381 = vmatpush2.msra.mxu0 %v380
    %382 = vmatprep.subr.mxu0 0.0
    %v383 = vand.u32 %v45, 4294901760
    %v384 = vsub.f32 %v45, %v383
    %v385 = vand.u32 %v384, 4294901760
    %v386 = vsub.f32 %v384, %v385
    %v387 = vand.u32 %v386, 4294901760
    %388 = vmatpush2.msra.mxu0 %v387
    %389 = vmatprep.subr.mxu0 0.0
    %v390 = vand.u32 %v44, 4294901760
    %v391 = vsub.f32 %v44, %v390
    %v392 = vand.u32 %v391, 4294901760
    %v393 = vsub.f32 %v391, %v392
    %v394 = vand.u32 %v393, 4294901760
    %395 = vmatpush2.msra.mxu0 %v394
    %v396 = vand.u32 %v27, 4294901760
    %397 = vmatprep.mubr.f32.mxu0 %v396
    %v398 = vand.u32 %v26, 4294901760
    %399 = vmatmul.mubr.f32.gmra.mxu0 %v398
    %v400 = vpop.f32.mrf.mxu0
    %v401 = vadd.f32 %v169, %v400
    %v402 = vpop.f32.mrf.mxu0
    %403 = vdwg.mxu0
    %404 = vmatprep.subr.mxu0 0.0
    %v405 = vand.u32 %v43, 4294901760
    %v406 = vsub.f32 %v43, %v405
    %407 = vmatpush1.msra.mxu0 %v406
    %408 = vmatprep.subr.mxu0 0.0
    %v409 = vand.u32 %v42, 4294901760
    %v410 = vsub.f32 %v42, %v409
    %411 = vmatpush1.msra.mxu0 %v410
    %412 = vmatprep.subr.mxu0 0.0
    %v413 = vand.u32 %v41, 4294901760
    %v414 = vsub.f32 %v41, %v413
    %415 = vmatpush1.msra.mxu0 %v414
    %416 = vmatprep.subr.mxu0 0.0
    %v417 = vand.u32 %v40, 4294901760
    %v418 = vsub.f32 %v40, %v417
    %419 = vmatpush1.msra.mxu0 %v418
    %420 = vmatprep.subr.mxu0 0.0
    %v421 = vand.u32 %v39, 4294901760
    %v422 = vsub.f32 %v39, %v421
    %423 = vmatpush1.msra.mxu0 %v422
    %424 = vmatprep.subr.mxu0 0.0
    %v425 = vand.u32 %v38, 4294901760
    %v426 = vsub.f32 %v38, %v425
    %427 = vmatpush1.msra.mxu0 %v426
    %428 = vmatprep.subr.mxu0 0.0
    %v429 = vand.u32 %v37, 4294901760
    %v430 = vsub.f32 %v37, %v429
    %431 = vmatpush1.msra.mxu0 %v430
    %432 = vmatprep.subr.mxu0 0.0
    %v433 = vand.u32 %v36, 4294901760
    %v434 = vsub.f32 %v36, %v433
    %435 = vmatpush1.msra.mxu0 %v434
    %436 = vmatprep.subr.mxu0 0.0
    %v437 = vand.u32 %v35, 4294901760
    %v438 = vsub.f32 %v35, %v437
    %439 = vmatpush1.msra.mxu0 %v438
    %440 = vmatprep.subr.mxu0 0.0
    %v441 = vand.u32 %v34, 4294901760
    %v442 = vsub.f32 %v34, %v441
    %443 = vmatpush1.msra.mxu0 %v442
    %444 = vmatprep.subr.mxu0 0.0
    %v445 = vand.u32 %v33, 4294901760
    %v446 = vsub.f32 %v33, %v445
    %447 = vmatpush1.msra.mxu0 %v446
    %448 = vmatprep.subr.mxu0 0.0
    %v449 = vand.u32 %v32, 4294901760
    %v450 = vsub.f32 %v32, %v449
    %451 = vmatpush1.msra.mxu0 %v450
    %452 = vmatprep.subr.mxu0 0.0
    %v453 = vand.u32 %v31, 4294901760
    %v454 = vsub.f32 %v31, %v453
    %455 = vmatpush1.msra.mxu0 %v454
    %456 = vmatprep.subr.mxu0 0.0
    %v457 = vand.u32 %v30, 4294901760
    %v458 = vsub.f32 %v30, %v457
    %459 = vmatpush1.msra.mxu0 %v458
    %460 = vmatprep.subr.mxu0 0.0
    %v461 = vand.u32 %v29, 4294901760
    %v462 = vsub.f32 %v29, %v461
    %463 = vmatpush1.msra.mxu0 %v462
    %464 = vmatprep.subr.mxu0 0.0
    %v465 = vand.u32 %v28, 4294901760
    %v466 = vsub.f32 %v28, %v465
    %467 = vmatpush1.msra.mxu0 %v466
    %468 = vmatprep.subr.mxu0 0.0
    %v469 = vand.u32 %v59, 4294901760
    %v470 = vsub.f32 %v59, %v469
    %471 = vmatpush2.msra.mxu0 %v470
    %472 = vmatprep.subr.mxu0 0.0
    %v473 = vand.u32 %v58, 4294901760
    %v474 = vsub.f32 %v58, %v473
    %475 = vmatpush2.msra.mxu0 %v474
    %476 = vmatprep.subr.mxu0 0.0
    %v477 = vand.u32 %v57, 4294901760
    %v478 = vsub.f32 %v57, %v477
    %479 = vmatpush2.msra.mxu0 %v478
    %480 = vmatprep.subr.mxu0 0.0
    %v481 = vand.u32 %v56, 4294901760
    %v482 = vsub.f32 %v56, %v481
    %483 = vmatpush2.msra.mxu0 %v482
    %484 = vmatprep.subr.mxu0 0.0
    %v485 = vand.u32 %v55, 4294901760
    %v486 = vsub.f32 %v55, %v485
    %487 = vmatpush2.msra.mxu0 %v486
    %488 = vmatprep.subr.mxu0 0.0
    %v489 = vand.u32 %v54, 4294901760
    %v490 = vsub.f32 %v54, %v489
    %491 = vmatpush2.msra.mxu0 %v490
    %492 = vmatprep.subr.mxu0 0.0
    %v493 = vand.u32 %v53, 4294901760
    %v494 = vsub.f32 %v53, %v493
    %495 = vmatpush2.msra.mxu0 %v494
    %496 = vmatprep.subr.mxu0 0.0
    %v497 = vand.u32 %v52, 4294901760
    %v498 = vsub.f32 %v52, %v497
    %499 = vmatpush2.msra.mxu0 %v498
    %500 = vmatprep.subr.mxu0 0.0
    %v501 = vand.u32 %v51, 4294901760
    %v502 = vsub.f32 %v51, %v501
    %503 = vmatpush2.msra.mxu0 %v502
    %504 = vmatprep.subr.mxu0 0.0
    %v505 = vand.u32 %v50, 4294901760
    %v506 = vsub.f32 %v50, %v505
    %507 = vmatpush2.msra.mxu0 %v506
    %508 = vmatprep.subr.mxu0 0.0
    %v509 = vand.u32 %v49, 4294901760
    %v510 = vsub.f32 %v49, %v509
    %511 = vmatpush2.msra.mxu0 %v510
    %512 = vmatprep.subr.mxu0 0.0
    %v513 = vand.u32 %v48, 4294901760
    %v514 = vsub.f32 %v48, %v513
    %515 = vmatpush2.msra.mxu0 %v514
    %516 = vmatprep.subr.mxu0 0.0
    %v517 = vand.u32 %v47, 4294901760
    %v518 = vsub.f32 %v47, %v517
    %519 = vmatpush2.msra.mxu0 %v518
    %520 = vmatprep.subr.mxu0 0.0
    %v521 = vand.u32 %v46, 4294901760
    %v522 = vsub.f32 %v46, %v521
    %523 = vmatpush2.msra.mxu0 %v522
    %524 = vmatprep.subr.mxu0 0.0
    %v525 = vand.u32 %v45, 4294901760
    %v526 = vsub.f32 %v45, %v525
    %527 = vmatpush2.msra.mxu0 %v526
    %528 = vmatprep.subr.mxu0 0.0
    %v529 = vand.u32 %v44, 4294901760
    %v530 = vsub.f32 %v44, %v529
    %531 = vmatpush2.msra.mxu0 %v530
    %v532 = vand.u32 %v27, 4294901760
    %v533 = vsub.f32 %v27, %v532
    %534 = vmatprep.mubr.f32.mxu0 %v533
    %v535 = vand.u32 %v26, 4294901760
    %v536 = vsub.f32 %v26, %v535
    %537 = vmatmul.mubr.f32.gmra.mxu0 %v536
    %v538 = vpop.f32.mrf.mxu0
    %v539 = vadd.f32 %v401, %v538
    %v540 = vpop.f32.mrf.mxu0
    %541 = vdwg.mxu0
    %542 = vmatprep.subr.mxu0 0.0
    %v543 = vand.u32 %v43, 4294901760
    %544 = vmatpush1.msra.mxu0 %v543
    %545 = vmatprep.subr.mxu0 0.0
    %v546 = vand.u32 %v42, 4294901760
    %547 = vmatpush1.msra.mxu0 %v546
    %548 = vmatprep.subr.mxu0 0.0
    %v549 = vand.u32 %v41, 4294901760
    %550 = vmatpush1.msra.mxu0 %v549
    %551 = vmatprep.subr.mxu0 0.0
    %v552 = vand.u32 %v40, 4294901760
    %553 = vmatpush1.msra.mxu0 %v552
    %554 = vmatprep.subr.mxu0 0.0
    %v555 = vand.u32 %v39, 4294901760
    %556 = vmatpush1.msra.mxu0 %v555
    %557 = vmatprep.subr.mxu0 0.0
    %v558 = vand.u32 %v38, 4294901760
    %559 = vmatpush1.msra.mxu0 %v558
    %560 = vmatprep.subr.mxu0 0.0
    %v561 = vand.u32 %v37, 4294901760
    %562 = vmatpush1.msra.mxu0 %v561
    %563 = vmatprep.subr.mxu0 0.0
    %v564 = vand.u32 %v36, 4294901760
    %565 = vmatpush1.msra.mxu0 %v564
    %566 = vmatprep.subr.mxu0 0.0
    %v567 = vand.u32 %v35, 4294901760
    %568 = vmatpush1.msra.mxu0 %v567
    %569 = vmatprep.subr.mxu0 0.0
    %v570 = vand.u32 %v34, 4294901760
    %571 = vmatpush1.msra.mxu0 %v570
    %572 = vmatprep.subr.mxu0 0.0
    %v573 = vand.u32 %v33, 4294901760
    %574 = vmatpush1.msra.mxu0 %v573
    %575 = vmatprep.subr.mxu0 0.0
    %v576 = vand.u32 %v32, 4294901760
    %577 = vmatpush1.msra.mxu0 %v576
    %578 = vmatprep.subr.mxu0 0.0
    %v579 = vand.u32 %v31, 4294901760
    %580 = vmatpush1.msra.mxu0 %v579
    %581 = vmatprep.subr.mxu0 0.0
    %v582 = vand.u32 %v30, 4294901760
    %583 = vmatpush1.msra.mxu0 %v582
    %584 = vmatprep.subr.mxu0 0.0
    %v585 = vand.u32 %v29, 4294901760
    %586 = vmatpush1.msra.mxu0 %v585
    %587 = vmatprep.subr.mxu0 0.0
    %v588 = vand.u32 %v28, 4294901760
    %589 = vmatpush1.msra.mxu0 %v588
    %590 = vmatprep.subr.mxu0 0.0
    %v591 = vand.u32 %v59, 4294901760
    %592 = vmatpush2.msra.mxu0 %v591
    %593 = vmatprep.subr.mxu0 0.0
    %v594 = vand.u32 %v58, 4294901760
    %595 = vmatpush2.msra.mxu0 %v594
    %596 = vmatprep.subr.mxu0 0.0
    %v597 = vand.u32 %v57, 4294901760
    %598 = vmatpush2.msra.mxu0 %v597
    %599 = vmatprep.subr.mxu0 0.0
    %v600 = vand.u32 %v56, 4294901760
    %601 = vmatpush2.msra.mxu0 %v600
    %602 = vmatprep.subr.mxu0 0.0
    %v603 = vand.u32 %v55, 4294901760
    %604 = vmatpush2.msra.mxu0 %v603
    %605 = vmatprep.subr.mxu0 0.0
    %v606 = vand.u32 %v54, 4294901760
    %607 = vmatpush2.msra.mxu0 %v606
    %608 = vmatprep.subr.mxu0 0.0
    %v609 = vand.u32 %v53, 4294901760
    %610 = vmatpush2.msra.mxu0 %v609
    %611 = vmatprep.subr.mxu0 0.0
    %v612 = vand.u32 %v52, 4294901760
    %613 = vmatpush2.msra.mxu0 %v612
    %614 = vmatprep.subr.mxu0 0.0
    %v615 = vand.u32 %v51, 4294901760
    %616 = vmatpush2.msra.mxu0 %v615
    %617 = vmatprep.subr.mxu0 0.0
    %v618 = vand.u32 %v50, 4294901760
    %619 = vmatpush2.msra.mxu0 %v618
    %620 = vmatprep.subr.mxu0 0.0
    %v621 = vand.u32 %v49, 4294901760
    %622 = vmatpush2.msra.mxu0 %v621
    %623 = vmatprep.subr.mxu0 0.0
    %v624 = vand.u32 %v48, 4294901760
    %625 = vmatpush2.msra.mxu0 %v624
    %626 = vmatprep.subr.mxu0 0.0
    %v627 = vand.u32 %v47, 4294901760
    %628 = vmatpush2.msra.mxu0 %v627
    %629 = vmatprep.subr.mxu0 0.0
    %v630 = vand.u32 %v46, 4294901760
    %631 = vmatpush2.msra.mxu0 %v630
    %632 = vmatprep.subr.mxu0 0.0
    %v633 = vand.u32 %v45, 4294901760
    %634 = vmatpush2.msra.mxu0 %v633
    %635 = vmatprep.subr.mxu0 0.0
    %v636 = vand.u32 %v44, 4294901760
    %637 = vmatpush2.msra.mxu0 %v636
    %v638 = vand.u32 %v27, 4294901760
    %v639 = vsub.f32 %v27, %v638
    %v640 = vand.u32 %v639, 4294901760
    %641 = vmatprep.mubr.f32.mxu0 %v640
    %v642 = vand.u32 %v26, 4294901760
    %v643 = vsub.f32 %v26, %v642
    %v644 = vand.u32 %v643, 4294901760
    %645 = vmatmul.mubr.f32.gmra.mxu0 %v644
    %v646 = vpop.f32.mrf.mxu0
    %v647 = vadd.f32 %v539, %v646
    %v648 = vpop.f32.mrf.mxu0
    %649 = vdwg.mxu0
    %650 = vmatprep.subr.mxu0 0.0
    %v651 = vand.u32 %v43, 4294901760
    %v652 = vsub.f32 %v43, %v651
    %v653 = vand.u32 %v652, 4294901760
    %654 = vmatpush1.msra.mxu0 %v653
    %655 = vmatprep.subr.mxu0 0.0
    %v656 = vand.u32 %v42, 4294901760
    %v657 = vsub.f32 %v42, %v656
    %v658 = vand.u32 %v657, 4294901760
    %659 = vmatpush1.msra.mxu0 %v658
    %660 = vmatprep.subr.mxu0 0.0
    %v661 = vand.u32 %v41, 4294901760
    %v662 = vsub.f32 %v41, %v661
    %v663 = vand.u32 %v662, 4294901760
    %664 = vmatpush1.msra.mxu0 %v663
    %665 = vmatprep.subr.mxu0 0.0
    %v666 = vand.u32 %v40, 4294901760
    %v667 = vsub.f32 %v40, %v666
    %v668 = vand.u32 %v667, 4294901760
    %669 = vmatpush1.msra.mxu0 %v668
    %670 = vmatprep.subr.mxu0 0.0
    %v671 = vand.u32 %v39, 4294901760
    %v672 = vsub.f32 %v39, %v671
    %v673 = vand.u32 %v672, 4294901760
    %674 = vmatpush1.msra.mxu0 %v673
    %675 = vmatprep.subr.mxu0 0.0
    %v676 = vand.u32 %v38, 4294901760
    %v677 = vsub.f32 %v38, %v676
    %v678 = vand.u32 %v677, 4294901760
    %679 = vmatpush1.msra.mxu0 %v678
    %680 = vmatprep.subr.mxu0 0.0
    %v681 = vand.u32 %v37, 4294901760
    %v682 = vsub.f32 %v37, %v681
    %v683 = vand.u32 %v682, 4294901760
    %684 = vmatpush1.msra.mxu0 %v683
    %685 = vmatprep.subr.mxu0 0.0
    %v686 = vand.u32 %v36, 4294901760
    %v687 = vsub.f32 %v36, %v686
    %v688 = vand.u32 %v687, 4294901760
    %689 = vmatpush1.msra.mxu0 %v688
    %690 = vmatprep.subr.mxu0 0.0
    %v691 = vand.u32 %v35, 4294901760
    %v692 = vsub.f32 %v35, %v691
    %v693 = vand.u32 %v692, 4294901760
    %694 = vmatpush1.msra.mxu0 %v693
    %695 = vmatprep.subr.mxu0 0.0
    %v696 = vand.u32 %v34, 4294901760
    %v697 = vsub.f32 %v34, %v696
    %v698 = vand.u32 %v697, 4294901760
    %699 = vmatpush1.msra.mxu0 %v698
    %700 = vmatprep.subr.mxu0 0.0
    %v701 = vand.u32 %v33, 4294901760
    %v702 = vsub.f32 %v33, %v701
    %v703 = vand.u32 %v702, 4294901760
    %704 = vmatpush1.msra.mxu0 %v703
    %705 = vmatprep.subr.mxu0 0.0
    %v706 = vand.u32 %v32, 4294901760
    %v707 = vsub.f32 %v32, %v706
    %v708 = vand.u32 %v707, 4294901760
    %709 = vmatpush1.msra.mxu0 %v708
    %710 = vmatprep.subr.mxu0 0.0
    %v711 = vand.u32 %v31, 4294901760
    %v712 = vsub.f32 %v31, %v711
    %v713 = vand.u32 %v712, 4294901760
    %714 = vmatpush1.msra.mxu0 %v713
    %715 = vmatprep.subr.mxu0 0.0
    %v716 = vand.u32 %v30, 4294901760
    %v717 = vsub.f32 %v30, %v716
    %v718 = vand.u32 %v717, 4294901760
    %719 = vmatpush1.msra.mxu0 %v718
    %720 = vmatprep.subr.mxu0 0.0
    %v721 = vand.u32 %v29, 4294901760
    %v722 = vsub.f32 %v29, %v721
    %v723 = vand.u32 %v722, 4294901760
    %724 = vmatpush1.msra.mxu0 %v723
    %725 = vmatprep.subr.mxu0 0.0
    %v726 = vand.u32 %v28, 4294901760
    %v727 = vsub.f32 %v28, %v726
    %v728 = vand.u32 %v727, 4294901760
    %729 = vmatpush1.msra.mxu0 %v728
    %730 = vmatprep.subr.mxu0 0.0
    %v731 = vand.u32 %v59, 4294901760
    %v732 = vsub.f32 %v59, %v731
    %v733 = vand.u32 %v732, 4294901760
    %734 = vmatpush2.msra.mxu0 %v733
    %735 = vmatprep.subr.mxu0 0.0
    %v736 = vand.u32 %v58, 4294901760
    %v737 = vsub.f32 %v58, %v736
    %v738 = vand.u32 %v737, 4294901760
    %739 = vmatpush2.msra.mxu0 %v738
    %740 = vmatprep.subr.mxu0 0.0
    %v741 = vand.u32 %v57, 4294901760
    %v742 = vsub.f32 %v57, %v741
    %v743 = vand.u32 %v742, 4294901760
    %744 = vmatpush2.msra.mxu0 %v743
    %745 = vmatprep.subr.mxu0 0.0
    %v746 = vand.u32 %v56, 4294901760
    %v747 = vsub.f32 %v56, %v746
    %v748 = vand.u32 %v747, 4294901760
    %749 = vmatpush2.msra.mxu0 %v748
    %750 = vmatprep.subr.mxu0 0.0
    %v751 = vand.u32 %v55, 4294901760
    %v752 = vsub.f32 %v55, %v751
    %v753 = vand.u32 %v752, 4294901760
    %754 = vmatpush2.msra.mxu0 %v753
    %755 = vmatprep.subr.mxu0 0.0
    %v756 = vand.u32 %v54, 4294901760
    %v757 = vsub.f32 %v54, %v756
    %v758 = vand.u32 %v757, 4294901760
    %759 = vmatpush2.msra.mxu0 %v758
    %760 = vmatprep.subr.mxu0 0.0
    %v761 = vand.u32 %v53, 4294901760
    %v762 = vsub.f32 %v53, %v761
    %v763 = vand.u32 %v762, 4294901760
    %764 = vmatpush2.msra.mxu0 %v763
    %765 = vmatprep.subr.mxu0 0.0
    %v766 = vand.u32 %v52, 4294901760
    %v767 = vsub.f32 %v52, %v766
    %v768 = vand.u32 %v767, 4294901760
    %769 = vmatpush2.msra.mxu0 %v768
    %770 = vmatprep.subr.mxu0 0.0
    %v771 = vand.u32 %v51, 4294901760
    %v772 = vsub.f32 %v51, %v771
    %v773 = vand.u32 %v772, 4294901760
    %774 = vmatpush2.msra.mxu0 %v773
    %775 = vmatprep.subr.mxu0 0.0
    %v776 = vand.u32 %v50, 4294901760
    %v777 = vsub.f32 %v50, %v776
    %v778 = vand.u32 %v777, 4294901760
    %779 = vmatpush2.msra.mxu0 %v778
    %780 = vmatprep.subr.mxu0 0.0
    %v781 = vand.u32 %v49, 4294901760
    %v782 = vsub.f32 %v49, %v781
    %v783 = vand.u32 %v782, 4294901760
    %784 = vmatpush2.msra.mxu0 %v783
    %785 = vmatprep.subr.mxu0 0.0
    %v786 = vand.u32 %v48, 4294901760
    %v787 = vsub.f32 %v48, %v786
    %v788 = vand.u32 %v787, 4294901760
    %789 = vmatpush2.msra.mxu0 %v788
    %790 = vmatprep.subr.mxu0 0.0
    %v791 = vand.u32 %v47, 4294901760
    %v792 = vsub.f32 %v47, %v791
    %v793 = vand.u32 %v792, 4294901760
    %794 = vmatpush2.msra.mxu0 %v793
    %795 = vmatprep.subr.mxu0 0.0
    %v796 = vand.u32 %v46, 4294901760
    %v797 = vsub.f32 %v46, %v796
    %v798 = vand.u32 %v797, 4294901760
    %799 = vmatpush2.msra.mxu0 %v798
    %800 = vmatprep.subr.mxu0 0.0
    %v801 = vand.u32 %v45, 4294901760
    %v802 = vsub.f32 %v45, %v801
    %v803 = vand.u32 %v802, 4294901760
    %804 = vmatpush2.msra.mxu0 %v803
    %805 = vmatprep.subr.mxu0 0.0
    %v806 = vand.u32 %v44, 4294901760
    %v807 = vsub.f32 %v44, %v806
    %v808 = vand.u32 %v807, 4294901760
    %809 = vmatpush2.msra.mxu0 %v808
    %v810 = vand.u32 %v27, 4294901760
    %811 = vmatprep.mubr.f32.mxu0 %v810
    %v812 = vand.u32 %v26, 4294901760
    %813 = vmatmul.mubr.f32.gmra.mxu0 %v812
    %v814 = vpop.f32.mrf.mxu0
    %v815 = vadd.f32 %v647, %v814
    %v816 = vpop.f32.mrf.mxu0
    %817 = vdwg.mxu0
    %818 = vmatprep.subr.mxu0 0.0
    %v819 = vand.u32 %v43, 4294901760
    %820 = vmatpush1.msra.mxu0 %v819
    %821 = vmatprep.subr.mxu0 0.0
    %v822 = vand.u32 %v42, 4294901760
    %823 = vmatpush1.msra.mxu0 %v822
    %824 = vmatprep.subr.mxu0 0.0
    %v825 = vand.u32 %v41, 4294901760
    %826 = vmatpush1.msra.mxu0 %v825
    %827 = vmatprep.subr.mxu0 0.0
    %v828 = vand.u32 %v40, 4294901760
    %829 = vmatpush1.msra.mxu0 %v828
    %830 = vmatprep.subr.mxu0 0.0
    %v831 = vand.u32 %v39, 4294901760
    %832 = vmatpush1.msra.mxu0 %v831
    %833 = vmatprep.subr.mxu0 0.0
    %v834 = vand.u32 %v38, 4294901760
    %835 = vmatpush1.msra.mxu0 %v834
    %836 = vmatprep.subr.mxu0 0.0
    %v837 = vand.u32 %v37, 4294901760
    %838 = vmatpush1.msra.mxu0 %v837
    %839 = vmatprep.subr.mxu0 0.0
    %v840 = vand.u32 %v36, 4294901760
    %841 = vmatpush1.msra.mxu0 %v840
    %842 = vmatprep.subr.mxu0 0.0
    %v843 = vand.u32 %v35, 4294901760
    %844 = vmatpush1.msra.mxu0 %v843
    %845 = vmatprep.subr.mxu0 0.0
    %v846 = vand.u32 %v34, 4294901760
    %847 = vmatpush1.msra.mxu0 %v846
    %848 = vmatprep.subr.mxu0 0.0
    %v849 = vand.u32 %v33, 4294901760
    %850 = vmatpush1.msra.mxu0 %v849
    %851 = vmatprep.subr.mxu0 0.0
    %v852 = vand.u32 %v32, 4294901760
    %853 = vmatpush1.msra.mxu0 %v852
    %854 = vmatprep.subr.mxu0 0.0
    %v855 = vand.u32 %v31, 4294901760
    %856 = vmatpush1.msra.mxu0 %v855
    %857 = vmatprep.subr.mxu0 0.0
    %v858 = vand.u32 %v30, 4294901760
    %859 = vmatpush1.msra.mxu0 %v858
    %860 = vmatprep.subr.mxu0 0.0
    %v861 = vand.u32 %v29, 4294901760
    %862 = vmatpush1.msra.mxu0 %v861
    %863 = vmatprep.subr.mxu0 0.0
    %v864 = vand.u32 %v28, 4294901760
    %865 = vmatpush1.msra.mxu0 %v864
    %866 = vmatprep.subr.mxu0 0.0
    %v867 = vand.u32 %v59, 4294901760
    %868 = vmatpush2.msra.mxu0 %v867
    %869 = vmatprep.subr.mxu0 0.0
    %v870 = vand.u32 %v58, 4294901760
    %871 = vmatpush2.msra.mxu0 %v870
    %872 = vmatprep.subr.mxu0 0.0
    %v873 = vand.u32 %v57, 4294901760
    %874 = vmatpush2.msra.mxu0 %v873
    %875 = vmatprep.subr.mxu0 0.0
    %v876 = vand.u32 %v56, 4294901760
    %877 = vmatpush2.msra.mxu0 %v876
    %878 = vmatprep.subr.mxu0 0.0
    %v879 = vand.u32 %v55, 4294901760
    %880 = vmatpush2.msra.mxu0 %v879
    %881 = vmatprep.subr.mxu0 0.0
    %v882 = vand.u32 %v54, 4294901760
    %883 = vmatpush2.msra.mxu0 %v882
    %884 = vmatprep.subr.mxu0 0.0
    %v885 = vand.u32 %v53, 4294901760
    %886 = vmatpush2.msra.mxu0 %v885
    %887 = vmatprep.subr.mxu0 0.0
    %v888 = vand.u32 %v52, 4294901760
    %889 = vmatpush2.msra.mxu0 %v888
    %890 = vmatprep.subr.mxu0 0.0
    %v891 = vand.u32 %v51, 4294901760
    %892 = vmatpush2.msra.mxu0 %v891
    %893 = vmatprep.subr.mxu0 0.0
    %v894 = vand.u32 %v50, 4294901760
    %895 = vmatpush2.msra.mxu0 %v894
    %896 = vmatprep.subr.mxu0 0.0
    %v897 = vand.u32 %v49, 4294901760
    %898 = vmatpush2.msra.mxu0 %v897
    %899 = vmatprep.subr.mxu0 0.0
    %v900 = vand.u32 %v48, 4294901760
    %901 = vmatpush2.msra.mxu0 %v900
    %902 = vmatprep.subr.mxu0 0.0
    %v903 = vand.u32 %v47, 4294901760
    %904 = vmatpush2.msra.mxu0 %v903
    %905 = vmatprep.subr.mxu0 0.0
    %v906 = vand.u32 %v46, 4294901760
    %907 = vmatpush2.msra.mxu0 %v906
    %908 = vmatprep.subr.mxu0 0.0
    %v909 = vand.u32 %v45, 4294901760
    %910 = vmatpush2.msra.mxu0 %v909
    %911 = vmatprep.subr.mxu0 0.0
    %v912 = vand.u32 %v44, 4294901760
    %913 = vmatpush2.msra.mxu0 %v912
    %v914 = vand.u32 %v27, 4294901760
    %915 = vmatprep.mubr.f32.mxu0 %v914
    %v916 = vand.u32 %v26, 4294901760
    %917 = vmatmul.mubr.f32.gmra.mxu0 %v916
    %v918 = vpop.f32.mrf.mxu0
    %v919 = vadd.f32 %v815, %v918
    %v920 = vpop.f32.mrf.mxu0
    %921 = vdwg.mxu0
    %922 = vst [vmem:[#allocation5] sm:$0xff] %v919
    // Predicated region
    $region14: #{_forward_impl.1} parent=1 // pred_check
      _
    $region15: #{_forward_impl.1} parent=1 // pred_check_branch
      %924 = sbr.rel (0) target = $region17
    $region16: #{_forward_impl.1} parent=1 // pred_region
      %s926 = ssub.s32 128, 128
      %927 = vsyncadd [#allocation4], %s926
      %s929 = sshll.u32 [#allocation5], 4
      %s930 = int_to_ptr.vmem [resolvable:$true] %s929
      %932 = dma.vmem_to_hbm [thread:$0]  %s930, 128, %s2, [#allocation4]
    $region17: #{_forward_impl.1} parent=1 // pred_fallthru
      _
    // Predicated region
    $region18: #{_forward_impl.1} parent=1 // pred_check
      _
    $region19: #{_forward_impl.1} parent=1 // pred_check_branch
      %934 = sbr.rel (0) target = $region21
    $region20: #{_forward_impl.1} parent=1 // pred_region
      %935 = dma.done [#allocation4], 128
    $region21: #{_forward_impl.1} parent=1 // pred_fallthru
      _
    %936 = vsyncpa [#allocation3], 1
    %937 = vsyncpa [#allocation4], 1

</llo_original>
